<compile_context>
chip_gen: v7x
topology: tpu7x:2x2x1
jax: 0.10.0
libtpu: 0.0.40
codegen_flags: <defaults>
</compile_context>

<pallas_src>
import jax
import jax.numpy as jnp
from jax.experimental import pallas as pl
from jax.experimental.pallas import tpu as pltpu


def _net_kernel(ids_ref,                       # SMEM  (S,)      int32 token ids
                xg_ref,                        # VMEM  (V, 8Hp)  per-token layer-0 gate bias (interleaved)
                b1_ref,                        # VMEM  (1, 8Hp)  layer-1 bias (interleaved, layer-0 half zero)
                w_ref,                         # VMEM  (2Hp,8Hp) fused skewed recurrent weight
                wfc1_ref, bfc1_ref,            # VMEM  (2Hp,Fp) (1,Fp)
                wfc2_ref, bfc2_ref,            # VMEM  (Fp, O)  (1, O)
                out_ref):                      # VMEM  (1, O)
    S = ids_ref.shape[0]
    G2 = w_ref.shape[0]            # 2*Hp: width of the fused [h0|h1] state / of one gate group
    b1row = b1_ref[...]            # (1, 8Hp)

    def dual_cell(z, c):
        # Both layers' cells fused: z = [i0|i1|f0|f1|g0|g1|o0|o1], c = [c0|c1].
        # Two whole-vreg EUP pushes; all slices land on 128-lane boundaries.
        sig = jax.nn.sigmoid(z)                                   # (1, 8Hp)
        th = jnp.tanh(z)                                          # (1, 8Hp)
        i = sig[:, 0 * G2:1 * G2]
        f = sig[:, 1 * G2:2 * G2]
        g = th[:, 2 * G2:3 * G2]
        o = sig[:, 3 * G2:4 * G2]
        c_new = f * c + i * g                                     # (1, 2Hp)
        h_new = o * jnp.tanh(c_new)
        return h_new, c_new

    # ---- Prologue: layer-0 cell for t=0 (h0[-1]=c0[-1]=0, so no matmul). ----
    # The gathered row's layer-1 gate lanes are zero, which keeps (h1, c1)
    # exactly zero through the fused cell (g=tanh(0)=0 -> c1=0 -> h1=0).
    z0 = xg_ref[pl.ds(ids_ref[0], 1), :]                          # (1, 8Hp)
    h_cat, c_cat = dual_cell(z0, jnp.zeros((1, G2), jnp.float32))

    # ---- S skewed super-steps, fully unrolled: ONE matmul + ONE dual cell. --
    # Step k produces layer-0 state for t=k+1 and layer-1 state for t=k.
    for k in range(S):
        if k < S - 1:
            # Token-dependent bias row (off the serial chain: depends only on ids).
            xk = xg_ref[pl.ds(ids_ref[k + 1], 1), :] + b1row
        else:
            xk = b1row          # last step: layer-0 half is dummy, result discarded
        z = jnp.dot(h_cat, w_ref[...],
                    preferred_element_type=jnp.float32) + xk      # (1, 8Hp)
        h_cat, c_cat = dual_cell(z, c_cat)
        # h_cat = [h0[k+1] | h1[k]],  c_cat = [c0[k+1] | c1[k]]

    # ---- Head on h1[S-1] (== PyTorch output[-1]).  wfc1's h0-rows are zero,
    # so no lane slice of h_cat is needed. ----
    y1 = jnp.maximum(
        jnp.dot(h_cat, wfc1_ref[...], preferred_element_type=jnp.float32)
        + bfc1_ref[...], 0.0)                                     # (1, Fp)
    y2 = (jnp.dot(y1, wfc2_ref[...], preferred_element_type=jnp.float32)
          + bfc2_ref[...])                                        # (1, O)
    # log_softmax along dim=1 (max-subtracted form)
    m = jnp.max(y2, axis=1, keepdims=True)
    s = y2 - m
    lse = jnp.log(jnp.sum(jnp.exp(s), axis=1, keepdims=True))
    out_ref[...] = s - lse


# ------------------------- wrapper-side weight prep -------------------------

def _gate_split_pad(w, H, Hp):
    """(R, 4H) in PyTorch [i|f|g|o] gate order -> list of 4 (R, Hp) zero-padded."""
    R = w.shape[0]
    g = jnp.pad(w.reshape(R, 4, H), ((0, 0), (0, 0), (0, Hp - H)))
    return [g[:, k, :] for k in range(4)]


def _interleave(l0, l1, R, H, Hp):
    """Build (R, 8Hp) with columns [i0|i1|f0|f1|g0|g1|o0|o1]; None -> zeros."""
    zeros4 = [jnp.zeros((R, Hp), jnp.float32)] * 4
    g0 = _gate_split_pad(l0, H, Hp) if l0 is not None else zeros4
    g1 = _gate_split_pad(l1, H, Hp) if l1 is not None else zeros4
    cols = []
    for k in range(4):
        cols += [g0[k], g1[k]]
    return jnp.concatenate(cols, axis=1)


def prepare_kernel_params(p):
    """Weight-only precompute (cacheable across calls): fold embedding into the
    layer-0 input projection, build the fused/skewed recurrent weight, and
    zero-pad everything so in-kernel gate slices are full 128-lane groups."""
    H = p["whh0"].shape[0]
    V = p["emb"].shape[0]
    O = p["wfc2"].shape[1]
    Hp = -(-H // 64) * 64          # per-layer gate pad -> gate groups (2Hp) lane-aligned
    Fp = -(-H // 128) * 128        # fc1 output padded to whole vregs

    # Per-token layer-0 gate bias table: emb @ Wih0 + (b_ih0 + b_hh0).
    emb_proj = jnp.dot(p["emb"], p["wih0"]) + p["b0"]              # (V, 4H)
    xg = _interleave(emb_proj, None, V, H, Hp)                     # (V, 8Hp)

    # Fused skewed recurrent weight: rows [h0 ; h1], cols interleaved gates.
    #   [[whh0, wih1],
    #    [  0 , whh1]]
    pad_rows = lambda w: jnp.pad(w, ((0, Hp - H), (0, 0)))
    top = _interleave(pad_rows(p["whh0"]), pad_rows(p["wih1"]), Hp, H, Hp)
    bot = _interleave(None, pad_rows(p["whh1"]), Hp, H, Hp)
    w_fused = jnp.concatenate([top, bot], axis=0)                  # (2Hp, 8Hp)

    b1row = _interleave(None, p["b1"], 1, H, Hp)                   # (1, 8Hp)

    # Head: fc1 reads only the h1 half of the fused state via zero h0-rows.
    wfc1 = jnp.zeros((2 * Hp, Fp), jnp.float32).at[Hp:Hp + H, :H].set(p["wfc1"])
    bfc1 = jnp.zeros((1, Fp), jnp.float32).at[:, :H].set(p["bfc1"])
    wfc2 = jnp.zeros((Fp, O), jnp.float32).at[:H, :].set(p["wfc2"])

    return dict(xg=xg, b1row=b1row, w=w_fused,
                wfc1=wfc1, bfc1=bfc1, wfc2=wfc2, bfc2=p["bfc2"],
                vocab=V, out_size=O)


def net_forward(ids, kp):
    # Safety: clamp token ids so the in-kernel dynamic row gather can never
    # read adjacent VMEM on an out-of-range id (PyTorch would raise instead).
    ids = jnp.clip(ids.astype(jnp.int32), 0, kp["vocab"] - 1)

    smem = pl.BlockSpec(memory_space=pltpu.MemorySpace.SMEM)
    vmem = pl.BlockSpec(memory_space=pltpu.MemorySpace.VMEM)
    args = (ids, kp["xg"], kp["b1row"], kp["w"],
            kp["wfc1"], kp["bfc1"], kp["wfc2"], kp["bfc2"])
    return pl.pallas_call(
        _net_kernel,
        out_shape=jax.ShapeDtypeStruct((1, kp["out_size"]), jnp.float32),
        in_specs=[smem] + [vmem] * (len(args) - 1),
        out_specs=vmem,
    )(*args)


# ------------------------------- init / ref ---------------------------------

def init_params(key, embedding_size, hidden_size, output_size):
    ks = jax.random.split(key, 14)
    k = 1.0 / jnp.sqrt(hidden_size)
    u = lambda kk, shape: jax.random.uniform(kk, shape, jnp.float32, -k, k)
    return {
        # nn.Embedding default init ~ N(0, 1)
        "emb": jax.random.normal(ks[0], (output_size, embedding_size), jnp.float32),
        # LSTM layer 0: weights stored transposed (in, 4H); biases combined
        "wih0": u(ks[1], (embedding_size, 4 * hidden_size)),
        "whh0": u(ks[2], (hidden_size, 4 * hidden_size)),
        "b0": (u(ks[3], (1, 4 * hidden_size)) + u(ks[4], (1, 4 * hidden_size))),
        # LSTM layer 1
        "wih1": u(ks[5], (hidden_size, 4 * hidden_size)),
        "whh1": u(ks[6], (hidden_size, 4 * hidden_size)),
        "b1": (u(ks[7], (1, 4 * hidden_size)) + u(ks[8], (1, 4 * hidden_size))),
        # fc1: (H, H), fc2: (H, O), stored transposed
        "wfc1": u(ks[9], (hidden_size, hidden_size)),
        "bfc1": u(ks[10], (1, hidden_size)),
        "wfc2": u(ks[11], (hidden_size, output_size)),
        "bfc2": u(ks[12], (1, output_size)),
    }


def ref_forward(ids, p):
    """Pure-JAX reference replicating PyTorch semantics."""
    H = p["whh0"].shape[0]
    x = p["emb"][ids]                                        # (S, E)

    def cell(xt, h, c, wih, whh, b):
        z = xt @ wih + h @ whh + b
        i = jax.nn.sigmoid(z[:, 0 * H:1 * H])
        f = jax.nn.sigmoid(z[:, 1 * H:2 * H])
        g = jnp.tanh(z[:, 2 * H:3 * H])
        o = jax.nn.sigmoid(z[:, 3 * H:4 * H])
        c = f * c + i * g
        return o * jnp.tanh(c), c

    h0 = c0 = h1 = c1 = jnp.zeros((1, H), jnp.float32)
    for t in range(ids.shape[0]):
        h0, c0 = cell(x[t:t + 1], h0, c0, p["wih0"], p["whh0"], p["b0"])
        h1, c1 = cell(h0, h1, c1, p["wih1"], p["whh1"], p["b1"])
    y1 = jax.nn.relu(h1 @ p["wfc1"] + p["bfc1"])
    y2 = y1 @ p["wfc2"] + p["bfc2"]
    return jax.nn.log_softmax(y2, axis=1)                    # (1, O)


if __name__ == "__main__":
    embedding_size, hidden_size, output_size, seq_len = 32, 32, 16, 8

    key = jax.random.PRNGKey(0)
    k_param, k_ids = jax.random.split(key)
    params = init_params(k_param, embedding_size, hidden_size, output_size)
    ids = jax.random.randint(k_ids, (seq_len,), 0, output_size, dtype=jnp.int32)

    kparams = prepare_kernel_params(params)   # weight-only; reuse across calls
    out = jax.block_until_ready(net_forward(ids, kparams))
    ref = jax.block_until_ready(ref_forward(ids, params))

    assert out.shape == (1, output_size)
    assert jnp.allclose(out, ref, atol=1e-4, rtol=1e-4), (out, ref)
    print("KERNEL_OK")
</pallas_src>

<mosaic_0001>
module attributes {stable_mosaic.version = 11 : i64} {
  func.func @_net_kernel(%arg0: memref<8xi32, #tpu.memory_space<smem>>, %arg1: memref<16x512xf32, #tpu.memory_space<vmem>>, %arg2: memref<1x512xf32, #tpu.memory_space<vmem>>, %arg3: memref<128x512xf32, #tpu.memory_space<vmem>>, %arg4: memref<128x128xf32, #tpu.memory_space<vmem>>, %arg5: memref<1x128xf32, #tpu.memory_space<vmem>>, %arg6: memref<128x16xf32, #tpu.memory_space<vmem>>, %arg7: memref<1x16xf32, #tpu.memory_space<vmem>>, %arg8: memref<1x16xf32, #tpu.memory_space<vmem>>) attributes {dimension_semantics = [], scalar_prefetch = 0 : i64, scratch_operands = 0 : i64, tpu.core_type = #tpu.core_type<tc>} {
    %c0 = arith.constant 0 : index
    %c0_0 = arith.constant 0 : index
    %0 = vector.load %arg2[%c0, %c0_0] : memref<1x512xf32, #tpu.memory_space<vmem>>, vector<1x512xf32>
    %c0_1 = arith.constant 0 : index
    %1 = memref.load %arg0[%c0_1] : memref<8xi32, #tpu.memory_space<smem>>
    %2 = arith.index_cast %1 : i32 to index
    %c0_2 = arith.constant 0 : index
    %3 = vector.load %arg1[%2, %c0_2] : memref<16x512xf32, #tpu.memory_space<vmem>>, vector<1x512xf32>
    %cst = arith.constant 0.000000e+00 : f32
    %4 = vector.broadcast %cst : f32 to vector<1x128xf32>
    %5 = arith.negf %3 : vector<1x512xf32>
    %6 = math.exp %5 : vector<1x512xf32>
    %cst_3 = arith.constant 1.000000e+00 : f32
    %7 = vector.broadcast %cst_3 : f32 to vector<1x512xf32>
    %8 = arith.addf %7, %6 : vector<1x512xf32>
    %9 = arith.divf %7, %8 : vector<1x512xf32>
    %10 = math.tanh %3 : vector<1x512xf32>
    %11 = vector.extract_strided_slice %9 {offsets = [0, 0], sizes = [1, 128], strides = [1, 1]} : vector<1x512xf32> to vector<1x128xf32>
    %12 = vector.extract_strided_slice %9 {offsets = [0, 128], sizes = [1, 128], strides = [1, 1]} : vector<1x512xf32> to vector<1x128xf32>
    %13 = vector.extract_strided_slice %10 {offsets = [0, 256], sizes = [1, 128], strides = [1, 1]} : vector<1x512xf32> to vector<1x128xf32>
    %14 = vector.extract_strided_slice %9 {offsets = [0, 384], sizes = [1, 128], strides = [1, 1]} : vector<1x512xf32> to vector<1x128xf32>
    %15 = arith.mulf %12, %4 : vector<1x128xf32>
    %16 = arith.mulf %11, %13 : vector<1x128xf32>
    %17 = arith.addf %15, %16 : vector<1x128xf32>
    %18 = math.tanh %17 : vector<1x128xf32>
    %19 = arith.mulf %14, %18 : vector<1x128xf32>
    %c1 = arith.constant 1 : index
    %20 = memref.load %arg0[%c1] : memref<8xi32, #tpu.memory_space<smem>>
    %21 = arith.index_cast %20 : i32 to index
    %c0_4 = arith.constant 0 : index
    %22 = vector.load %arg1[%21, %c0_4] : memref<16x512xf32, #tpu.memory_space<vmem>>, vector<1x512xf32>
    %23 = arith.addf %22, %0 : vector<1x512xf32>
    %c0_5 = arith.constant 0 : index
    %c0_6 = arith.constant 0 : index
    %24 = vector.load %arg3[%c0_5, %c0_6] : memref<128x512xf32, #tpu.memory_space<vmem>>, vector<128x512xf32>
    %cst_7 = arith.constant dense<0.000000e+00> : vector<1x512xf32>
    %25 = tpu.matmul %19, %24, %cst_7 {dimension_numbers = #tpu.dot_dimension_numbers<[1], [0], [0], [1], [0, 0, 1, 1], [], []>} : vector<1x128xf32>, vector<128x512xf32>, vector<1x512xf32> -> vector<1x512xf32>
    %26 = arith.addf %25, %23 : vector<1x512xf32>
    %27 = arith.negf %26 : vector<1x512xf32>
    %28 = math.exp %27 : vector<1x512xf32>
    %cst_8 = arith.constant 1.000000e+00 : f32
    %29 = vector.broadcast %cst_8 : f32 to vector<1x512xf32>
    %30 = arith.addf %29, %28 : vector<1x512xf32>
    %31 = arith.divf %29, %30 : vector<1x512xf32>
    %32 = math.tanh %26 : vector<1x512xf32>
    %33 = vector.extract_strided_slice %31 {offsets = [0, 0], sizes = [1, 128], strides = [1, 1]} : vector<1x512xf32> to vector<1x128xf32>
    %34 = vector.extract_strided_slice %31 {offsets = [0, 128], sizes = [1, 128], strides = [1, 1]} : vector<1x512xf32> to vector<1x128xf32>
    %35 = vector.extract_strided_slice %32 {offsets = [0, 256], sizes = [1, 128], strides = [1, 1]} : vector<1x512xf32> to vector<1x128xf32>
    %36 = vector.extract_strided_slice %31 {offsets = [0, 384], sizes = [1, 128], strides = [1, 1]} : vector<1x512xf32> to vector<1x128xf32>
    %37 = arith.mulf %34, %17 : vector<1x128xf32>
    %38 = arith.mulf %33, %35 : vector<1x128xf32>
    %39 = arith.addf %37, %38 : vector<1x128xf32>
    %40 = math.tanh %39 : vector<1x128xf32>
    %41 = arith.mulf %36, %40 : vector<1x128xf32>
    %c2 = arith.constant 2 : index
    %42 = memref.load %arg0[%c2] : memref<8xi32, #tpu.memory_space<smem>>
    %43 = arith.index_cast %42 : i32 to index
    %c0_9 = arith.constant 0 : index
    %44 = vector.load %arg1[%43, %c0_9] : memref<16x512xf32, #tpu.memory_space<vmem>>, vector<1x512xf32>
    %45 = arith.addf %44, %0 : vector<1x512xf32>
    %c0_10 = arith.constant 0 : index
    %c0_11 = arith.constant 0 : index
    %46 = vector.load %arg3[%c0_10, %c0_11] : memref<128x512xf32, #tpu.memory_space<vmem>>, vector<128x512xf32>
    %cst_12 = arith.constant dense<0.000000e+00> : vector<1x512xf32>
    %47 = tpu.matmul %41, %46, %cst_12 {dimension_numbers = #tpu.dot_dimension_numbers<[1], [0], [0], [1], [0, 0, 1, 1], [], []>} : vector<1x128xf32>, vector<128x512xf32>, vector<1x512xf32> -> vector<1x512xf32>
    %48 = arith.addf %47, %45 : vector<1x512xf32>
    %49 = arith.negf %48 : vector<1x512xf32>
    %50 = math.exp %49 : vector<1x512xf32>
    %cst_13 = arith.constant 1.000000e+00 : f32
    %51 = vector.broadcast %cst_13 : f32 to vector<1x512xf32>
    %52 = arith.addf %51, %50 : vector<1x512xf32>
    %53 = arith.divf %51, %52 : vector<1x512xf32>
    %54 = math.tanh %48 : vector<1x512xf32>
    %55 = vector.extract_strided_slice %53 {offsets = [0, 0], sizes = [1, 128], strides = [1, 1]} : vector<1x512xf32> to vector<1x128xf32>
    %56 = vector.extract_strided_slice %53 {offsets = [0, 128], sizes = [1, 128], strides = [1, 1]} : vector<1x512xf32> to vector<1x128xf32>
    %57 = vector.extract_strided_slice %54 {offsets = [0, 256], sizes = [1, 128], strides = [1, 1]} : vector<1x512xf32> to vector<1x128xf32>
    %58 = vector.extract_strided_slice %53 {offsets = [0, 384], sizes = [1, 128], strides = [1, 1]} : vector<1x512xf32> to vector<1x128xf32>
    %59 = arith.mulf %56, %39 : vector<1x128xf32>
    %60 = arith.mulf %55, %57 : vector<1x128xf32>
    %61 = arith.addf %59, %60 : vector<1x128xf32>
    %62 = math.tanh %61 : vector<1x128xf32>
    %63 = arith.mulf %58, %62 : vector<1x128xf32>
    %c3 = arith.constant 3 : index
    %64 = memref.load %arg0[%c3] : memref<8xi32, #tpu.memory_space<smem>>
    %65 = arith.index_cast %64 : i32 to index
    %c0_14 = arith.constant 0 : index
    %66 = vector.load %arg1[%65, %c0_14] : memref<16x512xf32, #tpu.memory_space<vmem>>, vector<1x512xf32>
    %67 = arith.addf %66, %0 : vector<1x512xf32>
    %c0_15 = arith.constant 0 : index
    %c0_16 = arith.constant 0 : index
    %68 = vector.load %arg3[%c0_15, %c0_16] : memref<128x512xf32, #tpu.memory_space<vmem>>, vector<128x512xf32>
    %cst_17 = arith.constant dense<0.000000e+00> : vector<1x512xf32>
    %69 = tpu.matmul %63, %68, %cst_17 {dimension_numbers = #tpu.dot_dimension_numbers<[1], [0], [0], [1], [0, 0, 1, 1], [], []>} : vector<1x128xf32>, vector<128x512xf32>, vector<1x512xf32> -> vector<1x512xf32>
    %70 = arith.addf %69, %67 : vector<1x512xf32>
    %71 = arith.negf %70 : vector<1x512xf32>
    %72 = math.exp %71 : vector<1x512xf32>
    %cst_18 = arith.constant 1.000000e+00 : f32
    %73 = vector.broadcast %cst_18 : f32 to vector<1x512xf32>
    %74 = arith.addf %73, %72 : vector<1x512xf32>
    %75 = arith.divf %73, %74 : vector<1x512xf32>
    %76 = math.tanh %70 : vector<1x512xf32>
    %77 = vector.extract_strided_slice %75 {offsets = [0, 0], sizes = [1, 128], strides = [1, 1]} : vector<1x512xf32> to vector<1x128xf32>
    %78 = vector.extract_strided_slice %75 {offsets = [0, 128], sizes = [1, 128], strides = [1, 1]} : vector<1x512xf32> to vector<1x128xf32>
    %79 = vector.extract_strided_slice %76 {offsets = [0, 256], sizes = [1, 128], strides = [1, 1]} : vector<1x512xf32> to vector<1x128xf32>
    %80 = vector.extract_strided_slice %75 {offsets = [0, 384], sizes = [1, 128], strides = [1, 1]} : vector<1x512xf32> to vector<1x128xf32>
    %81 = arith.mulf %78, %61 : vector<1x128xf32>
    %82 = arith.mulf %77, %79 : vector<1x128xf32>
    %83 = arith.addf %81, %82 : vector<1x128xf32>
    %84 = math.tanh %83 : vector<1x128xf32>
    %85 = arith.mulf %80, %84 : vector<1x128xf32>
    %c4 = arith.constant 4 : index
    %86 = memref.load %arg0[%c4] : memref<8xi32, #tpu.memory_space<smem>>
    %87 = arith.index_cast %86 : i32 to index
    %c0_19 = arith.constant 0 : index
    %88 = vector.load %arg1[%87, %c0_19] : memref<16x512xf32, #tpu.memory_space<vmem>>, vector<1x512xf32>
    %89 = arith.addf %88, %0 : vector<1x512xf32>
    %c0_20 = arith.constant 0 : index
    %c0_21 = arith.constant 0 : index
    %90 = vector.load %arg3[%c0_20, %c0_21] : memref<128x512xf32, #tpu.memory_space<vmem>>, vector<128x512xf32>
    %cst_22 = arith.constant dense<0.000000e+00> : vector<1x512xf32>
    %91 = tpu.matmul %85, %90, %cst_22 {dimension_numbers = #tpu.dot_dimension_numbers<[1], [0], [0], [1], [0, 0, 1, 1], [], []>} : vector<1x128xf32>, vector<128x512xf32>, vector<1x512xf32> -> vector<1x512xf32>
    %92 = arith.addf %91, %89 : vector<1x512xf32>
    %93 = arith.negf %92 : vector<1x512xf32>
    %94 = math.exp %93 : vector<1x512xf32>
    %cst_23 = arith.constant 1.000000e+00 : f32
    %95 = vector.broadcast %cst_23 : f32 to vector<1x512xf32>
    %96 = arith.addf %95, %94 : vector<1x512xf32>
    %97 = arith.divf %95, %96 : vector<1x512xf32>
    %98 = math.tanh %92 : vector<1x512xf32>
    %99 = vector.extract_strided_slice %97 {offsets = [0, 0], sizes = [1, 128], strides = [1, 1]} : vector<1x512xf32> to vector<1x128xf32>
    %100 = vector.extract_strided_slice %97 {offsets = [0, 128], sizes = [1, 128], strides = [1, 1]} : vector<1x512xf32> to vector<1x128xf32>
    %101 = vector.extract_strided_slice %98 {offsets = [0, 256], sizes = [1, 128], strides = [1, 1]} : vector<1x512xf32> to vector<1x128xf32>
    %102 = vector.extract_strided_slice %97 {offsets = [0, 384], sizes = [1, 128], strides = [1, 1]} : vector<1x512xf32> to vector<1x128xf32>
    %103 = arith.mulf %100, %83 : vector<1x128xf32>
    %104 = arith.mulf %99, %101 : vector<1x128xf32>
    %105 = arith.addf %103, %104 : vector<1x128xf32>
    %106 = math.tanh %105 : vector<1x128xf32>
    %107 = arith.mulf %102, %106 : vector<1x128xf32>
    %c5 = arith.constant 5 : index
    %108 = memref.load %arg0[%c5] : memref<8xi32, #tpu.memory_space<smem>>
    %109 = arith.index_cast %108 : i32 to index
    %c0_24 = arith.constant 0 : index
    %110 = vector.load %arg1[%109, %c0_24] : memref<16x512xf32, #tpu.memory_space<vmem>>, vector<1x512xf32>
    %111 = arith.addf %110, %0 : vector<1x512xf32>
    %c0_25 = arith.constant 0 : index
    %c0_26 = arith.constant 0 : index
    %112 = vector.load %arg3[%c0_25, %c0_26] : memref<128x512xf32, #tpu.memory_space<vmem>>, vector<128x512xf32>
    %cst_27 = arith.constant dense<0.000000e+00> : vector<1x512xf32>
    %113 = tpu.matmul %107, %112, %cst_27 {dimension_numbers = #tpu.dot_dimension_numbers<[1], [0], [0], [1], [0, 0, 1, 1], [], []>} : vector<1x128xf32>, vector<128x512xf32>, vector<1x512xf32> -> vector<1x512xf32>
    %114 = arith.addf %113, %111 : vector<1x512xf32>
    %115 = arith.negf %114 : vector<1x512xf32>
    %116 = math.exp %115 : vector<1x512xf32>
    %cst_28 = arith.constant 1.000000e+00 : f32
    %117 = vector.broadcast %cst_28 : f32 to vector<1x512xf32>
    %118 = arith.addf %117, %116 : vector<1x512xf32>
    %119 = arith.divf %117, %118 : vector<1x512xf32>
    %120 = math.tanh %114 : vector<1x512xf32>
    %121 = vector.extract_strided_slice %119 {offsets = [0, 0], sizes = [1, 128], strides = [1, 1]} : vector<1x512xf32> to vector<1x128xf32>
    %122 = vector.extract_strided_slice %119 {offsets = [0, 128], sizes = [1, 128], strides = [1, 1]} : vector<1x512xf32> to vector<1x128xf32>
    %123 = vector.extract_strided_slice %120 {offsets = [0, 256], sizes = [1, 128], strides = [1, 1]} : vector<1x512xf32> to vector<1x128xf32>
    %124 = vector.extract_strided_slice %119 {offsets = [0, 384], sizes = [1, 128], strides = [1, 1]} : vector<1x512xf32> to vector<1x128xf32>
    %125 = arith.mulf %122, %105 : vector<1x128xf32>
    %126 = arith.mulf %121, %123 : vector<1x128xf32>
    %127 = arith.addf %125, %126 : vector<1x128xf32>
    %128 = math.tanh %127 : vector<1x128xf32>
    %129 = arith.mulf %124, %128 : vector<1x128xf32>
    %c6 = arith.constant 6 : index
    %130 = memref.load %arg0[%c6] : memref<8xi32, #tpu.memory_space<smem>>
    %131 = arith.index_cast %130 : i32 to index
    %c0_29 = arith.constant 0 : index
    %132 = vector.load %arg1[%131, %c0_29] : memref<16x512xf32, #tpu.memory_space<vmem>>, vector<1x512xf32>
    %133 = arith.addf %132, %0 : vector<1x512xf32>
    %c0_30 = arith.constant 0 : index
    %c0_31 = arith.constant 0 : index
    %134 = vector.load %arg3[%c0_30, %c0_31] : memref<128x512xf32, #tpu.memory_space<vmem>>, vector<128x512xf32>
    %cst_32 = arith.constant dense<0.000000e+00> : vector<1x512xf32>
    %135 = tpu.matmul %129, %134, %cst_32 {dimension_numbers = #tpu.dot_dimension_numbers<[1], [0], [0], [1], [0, 0, 1, 1], [], []>} : vector<1x128xf32>, vector<128x512xf32>, vector<1x512xf32> -> vector<1x512xf32>
    %136 = arith.addf %135, %133 : vector<1x512xf32>
    %137 = arith.negf %136 : vector<1x512xf32>
    %138 = math.exp %137 : vector<1x512xf32>
    %cst_33 = arith.constant 1.000000e+00 : f32
    %139 = vector.broadcast %cst_33 : f32 to vector<1x512xf32>
    %140 = arith.addf %139, %138 : vector<1x512xf32>
    %141 = arith.divf %139, %140 : vector<1x512xf32>
    %142 = math.tanh %136 : vector<1x512xf32>
    %143 = vector.extract_strided_slice %141 {offsets = [0, 0], sizes = [1, 128], strides = [1, 1]} : vector<1x512xf32> to vector<1x128xf32>
    %144 = vector.extract_strided_slice %141 {offsets = [0, 128], sizes = [1, 128], strides = [1, 1]} : vector<1x512xf32> to vector<1x128xf32>
    %145 = vector.extract_strided_slice %142 {offsets = [0, 256], sizes = [1, 128], strides = [1, 1]} : vector<1x512xf32> to vector<1x128xf32>
    %146 = vector.extract_strided_slice %141 {offsets = [0, 384], sizes = [1, 128], strides = [1, 1]} : vector<1x512xf32> to vector<1x128xf32>
    %147 = arith.mulf %144, %127 : vector<1x128xf32>
    %148 = arith.mulf %143, %145 : vector<1x128xf32>
    %149 = arith.addf %147, %148 : vector<1x128xf32>
    %150 = math.tanh %149 : vector<1x128xf32>
    %151 = arith.mulf %146, %150 : vector<1x128xf32>
    %c7 = arith.constant 7 : index
    %152 = memref.load %arg0[%c7] : memref<8xi32, #tpu.memory_space<smem>>
    %153 = arith.index_cast %152 : i32 to index
    %c0_34 = arith.constant 0 : index
    %154 = vector.load %arg1[%153, %c0_34] : memref<16x512xf32, #tpu.memory_space<vmem>>, vector<1x512xf32>
    %155 = arith.addf %154, %0 : vector<1x512xf32>
    %c0_35 = arith.constant 0 : index
    %c0_36 = arith.constant 0 : index
    %156 = vector.load %arg3[%c0_35, %c0_36] : memref<128x512xf32, #tpu.memory_space<vmem>>, vector<128x512xf32>
    %cst_37 = arith.constant dense<0.000000e+00> : vector<1x512xf32>
    %157 = tpu.matmul %151, %156, %cst_37 {dimension_numbers = #tpu.dot_dimension_numbers<[1], [0], [0], [1], [0, 0, 1, 1], [], []>} : vector<1x128xf32>, vector<128x512xf32>, vector<1x512xf32> -> vector<1x512xf32>
    %158 = arith.addf %157, %155 : vector<1x512xf32>
    %159 = arith.negf %158 : vector<1x512xf32>
    %160 = math.exp %159 : vector<1x512xf32>
    %cst_38 = arith.constant 1.000000e+00 : f32
    %161 = vector.broadcast %cst_38 : f32 to vector<1x512xf32>
    %162 = arith.addf %161, %160 : vector<1x512xf32>
    %163 = arith.divf %161, %162 : vector<1x512xf32>
    %164 = math.tanh %158 : vector<1x512xf32>
    %165 = vector.extract_strided_slice %163 {offsets = [0, 0], sizes = [1, 128], strides = [1, 1]} : vector<1x512xf32> to vector<1x128xf32>
    %166 = vector.extract_strided_slice %163 {offsets = [0, 128], sizes = [1, 128], strides = [1, 1]} : vector<1x512xf32> to vector<1x128xf32>
    %167 = vector.extract_strided_slice %164 {offsets = [0, 256], sizes = [1, 128], strides = [1, 1]} : vector<1x512xf32> to vector<1x128xf32>
    %168 = vector.extract_strided_slice %163 {offsets = [0, 384], sizes = [1, 128], strides = [1, 1]} : vector<1x512xf32> to vector<1x128xf32>
    %169 = arith.mulf %166, %149 : vector<1x128xf32>
    %170 = arith.mulf %165, %167 : vector<1x128xf32>
    %171 = arith.addf %169, %170 : vector<1x128xf32>
    %172 = math.tanh %171 : vector<1x128xf32>
    %173 = arith.mulf %168, %172 : vector<1x128xf32>
    %c0_39 = arith.constant 0 : index
    %c0_40 = arith.constant 0 : index
    %174 = vector.load %arg3[%c0_39, %c0_40] : memref<128x512xf32, #tpu.memory_space<vmem>>, vector<128x512xf32>
    %cst_41 = arith.constant dense<0.000000e+00> : vector<1x512xf32>
    %175 = tpu.matmul %173, %174, %cst_41 {dimension_numbers = #tpu.dot_dimension_numbers<[1], [0], [0], [1], [0, 0, 1, 1], [], []>} : vector<1x128xf32>, vector<128x512xf32>, vector<1x512xf32> -> vector<1x512xf32>
    %176 = arith.addf %175, %0 : vector<1x512xf32>
    %177 = arith.negf %176 : vector<1x512xf32>
    %178 = math.exp %177 : vector<1x512xf32>
    %cst_42 = arith.constant 1.000000e+00 : f32
    %179 = vector.broadcast %cst_42 : f32 to vector<1x512xf32>
    %180 = arith.addf %179, %178 : vector<1x512xf32>
    %181 = arith.divf %179, %180 : vector<1x512xf32>
    %182 = math.tanh %176 : vector<1x512xf32>
    %183 = vector.extract_strided_slice %181 {offsets = [0, 0], sizes = [1, 128], strides = [1, 1]} : vector<1x512xf32> to vector<1x128xf32>
    %184 = vector.extract_strided_slice %181 {offsets = [0, 128], sizes = [1, 128], strides = [1, 1]} : vector<1x512xf32> to vector<1x128xf32>
    %185 = vector.extract_strided_slice %182 {offsets = [0, 256], sizes = [1, 128], strides = [1, 1]} : vector<1x512xf32> to vector<1x128xf32>
    %186 = vector.extract_strided_slice %181 {offsets = [0, 384], sizes = [1, 128], strides = [1, 1]} : vector<1x512xf32> to vector<1x128xf32>
    %187 = arith.mulf %184, %171 : vector<1x128xf32>
    %188 = arith.mulf %183, %185 : vector<1x128xf32>
    %189 = arith.addf %187, %188 : vector<1x128xf32>
    %190 = math.tanh %189 : vector<1x128xf32>
    %191 = arith.mulf %186, %190 : vector<1x128xf32>
    %c0_43 = arith.constant 0 : index
    %c0_44 = arith.constant 0 : index
    %192 = vector.load %arg4[%c0_43, %c0_44] : memref<128x128xf32, #tpu.memory_space<vmem>>, vector<128x128xf32>
    %cst_45 = arith.constant dense<0.000000e+00> : vector<1x128xf32>
    %193 = tpu.matmul %191, %192, %cst_45 {dimension_numbers = #tpu.dot_dimension_numbers<[1], [0], [0], [1], [0, 0, 1, 1], [], []>} : vector<1x128xf32>, vector<128x128xf32>, vector<1x128xf32> -> vector<1x128xf32>
    %c0_46 = arith.constant 0 : index
    %c0_47 = arith.constant 0 : index
    %194 = vector.load %arg5[%c0_46, %c0_47] : memref<1x128xf32, #tpu.memory_space<vmem>>, vector<1x128xf32>
    %195 = arith.addf %193, %194 : vector<1x128xf32>
    %cst_48 = arith.constant 0.000000e+00 : f32
    %196 = vector.broadcast %cst_48 : f32 to vector<1x128xf32>
    %197 = arith.maximumf %195, %196 : vector<1x128xf32>
    %c0_49 = arith.constant 0 : index
    %c0_50 = arith.constant 0 : index
    %198 = vector.load %arg6[%c0_49, %c0_50] : memref<128x16xf32, #tpu.memory_space<vmem>>, vector<128x16xf32>
    %cst_51 = arith.constant dense<0.000000e+00> : vector<1x16xf32>
    %199 = tpu.matmul %197, %198, %cst_51 {dimension_numbers = #tpu.dot_dimension_numbers<[1], [0], [0], [1], [0, 0, 1, 1], [], []>} : vector<1x128xf32>, vector<128x16xf32>, vector<1x16xf32> -> vector<1x16xf32>
    %c0_52 = arith.constant 0 : index
    %c0_53 = arith.constant 0 : index
    %200 = vector.load %arg7[%c0_52, %c0_53] : memref<1x16xf32, #tpu.memory_space<vmem>>, vector<1x16xf32>
    %201 = arith.addf %199, %200 : vector<1x16xf32>
    %cst_54 = arith.constant dense<0xFF800000> : vector<1xf32>
    %202 = vector.multi_reduction <maximumf>, %201, %cst_54 [1] : vector<1x16xf32> to vector<1xf32>
    %203 = vector.shape_cast %202 : vector<1xf32> to vector<1x1xf32>
    %204 = vector.broadcast %203 : vector<1x1xf32> to vector<1x16xf32>
    %205 = arith.subf %201, %204 : vector<1x16xf32>
    %206 = math.exp %205 : vector<1x16xf32>
    %cst_55 = arith.constant dense<0.000000e+00> : vector<1xf32>
    %207 = vector.multi_reduction <add>, %206, %cst_55 [1] : vector<1x16xf32> to vector<1xf32>
    %208 = vector.shape_cast %207 : vector<1xf32> to vector<1x1xf32>
    %209 = math.log %208 : vector<1x1xf32>
    %210 = vector.broadcast %209 : vector<1x1xf32> to vector<1x16xf32>
    %211 = arith.subf %205, %210 : vector<1x16xf32>
    %c0_56 = arith.constant 0 : index
    %c0_57 = arith.constant 0 : index
    %212 = vector.load %arg8[%c0_56, %c0_57] : memref<1x16xf32, #tpu.memory_space<vmem>>, vector<1x16xf32>
    tpu.vector_store %arg8[%c0_56, %c0_57], %211 {strides = array<i32>} : memref<1x16xf32, #tpu.memory_space<vmem>>, vector<1x16xf32>,
    return
  }
}

</mosaic_0001>

<llo_original>
// kernel: tpu_custom_call.1
$region0: #{tpu_custom_call.1}
  #allocation0 [shape = 'u32[]', space=smem, size = 0x4, offset = 0x4, fixed_abs, tag = 'smem constant byte address 0x4 - core index']
  #allocation1 [shape = 'u32[144,128]{1,0:T(1,128)}', space=vmem, size = 0x12000, scoped, tag = 'internal scratch']
  %s0 = inlined_call_operand.vmem [shape: s32[8], index: 0, kind: input, shape index: {}]
  %s1 = inlined_call_operand.hbm [shape: f32[16,512], index: 1, kind: input, shape index: {}]
  %s2 = inlined_call_operand.vmem [shape: f32[1,512], index: 2, kind: input, shape index: {}]
  %s3 = inlined_call_operand.hbm [shape: f32[128,512], index: 3, kind: input, shape index: {}]
  %s4 = inlined_call_operand.vmem [shape: f32[128,128], index: 4, kind: input, shape index: {}]
  %s5 = inlined_call_operand.vmem [shape: f32[1,128], index: 5, kind: input, shape index: {}]
  %s6 = inlined_call_operand.vmem [shape: f32[128,16], index: 6, kind: input, shape index: {}]
  %s7 = inlined_call_operand.vmem [shape: f32[1,16], index: 7, kind: input, shape index: {}]
  %s8 = inlined_call_operand.hbm [shape: f32[1,16], index: 8, kind: output, shape index: {}]
  %s9 = sld [smem:[#allocation0]]
  $region54: #{tpu_custom_call.1} parent=0
    _
  %s11 = ssub.s32 1, %s9
  %s12 = scalar_select 0, %s11, %s9
  $region1: #{tpu_custom_call.1} parent=0
    #allocation2 [shape = 'u8[512]{0}', space=smem, size = 0x200, scoped, tag = 'input window, operand 0, single buffered']
    #allocation3 [shape = 's32[1]{0}', space=sflag, size = 0x4, scoped, tag = 'scoped memory for tpu_custom_call.1']
    #allocation4 [shape = 's32[1]{0}', space=sflag, size = 0x4, scoped, tag = 'scoped memory for tpu_custom_call.1']
    #allocation5 [shape = 's32[1]{0}', space=sflag, size = 0x4, scoped, tag = 'scoped memory for tpu_custom_call.1']
    #allocation6 [shape = 'u8[32768]{0}', space=vmem, size = 0x8000, scoped, tag = 'input window, operand 1, single buffered']
    #allocation7 [shape = 'u8[262144]{0}', space=vmem, size = 0x40000, scoped, tag = 'input window, operand 3, single buffered']
    #allocation8 [shape = 's32[1]{0}', space=sflag, size = 0x4, scoped, tag = 'scoped memory for tpu_custom_call.1']
    #allocation9 [shape = 'u8[512]{0}', space=vmem, size = 0x400, scoped, tag = 'output window, operand 0, single buffered']
    %13 = vsyncpa [#allocation5], 0
    %14 = vsyncpa [#allocation3], 0
    %15 = vsyncpa [#allocation8], 0
    %16 = vsyncpa [#allocation4], 0
    // Predicated region
    $region2: #{tpu_custom_call.1} parent=1 // pred_check
      _
    $region3: #{tpu_custom_call.1} parent=1 // pred_check_branch
      %18 = sbr.rel (0) target = $region5
    $region4: #{tpu_custom_call.1} parent=1 // pred_region
      %s20 = ssub.s32 16, 16
      %21 = vsyncadd [#allocation5], %s20
      %s23 = sshll.u32 %s0, 4
      %s24 = int_to_ptr.vmem [resolvable:$true] %s23
      %26 = dma.vmem_to_smem %s24, 16, [#allocation2], [#allocation5]
    $region5: #{tpu_custom_call.1} parent=1 // pred_fallthru
      _
    // Predicated region
    $region6: #{tpu_custom_call.1} parent=1 // pred_check
      _
    $region7: #{tpu_custom_call.1} parent=1 // pred_check_branch
      %28 = sbr.rel (0) target = $region9
    $region8: #{tpu_custom_call.1} parent=1 // pred_region
      %s30 = ssub.s32 1024, 1024
      %31 = vsyncadd [#allocation3], %s30
      %s32 = sshll.u32 [#allocation6], 4
      %s33 = int_to_ptr.vmem [resolvable:$true] %s32
      %38 = dma.hbm_to_vmem [thread:$0]  %s1, 1024, %s33, [#allocation3], 512, 512, 32
    $region9: #{tpu_custom_call.1} parent=1 // pred_fallthru
      _
    // Predicated region
    $region10: #{tpu_custom_call.1} parent=1 // pred_check
      _
    $region11: #{tpu_custom_call.1} parent=1 // pred_check_branch
      %40 = sbr.rel (0) target = $region13
    $region12: #{tpu_custom_call.1} parent=1 // pred_region
      _
    $region13: #{tpu_custom_call.1} parent=1 // pred_fallthru
      _
    // Predicated region
    $region14: #{tpu_custom_call.1} parent=1 // pred_check
      _
    $region15: #{tpu_custom_call.1} parent=1 // pred_check_branch
      %42 = sbr.rel (0) target = $region17
    $region16: #{tpu_custom_call.1} parent=1 // pred_region
      %s44 = ssub.s32 8192, 8192
      %45 = vsyncadd [#allocation8], %s44
      %s46 = sshll.u32 [#allocation7], 4
      %s47 = int_to_ptr.vmem [resolvable:$true] %s46
      %52 = dma.hbm_to_vmem [thread:$0]  %s3, 8192, %s47, [#allocation8], 512, 512, 32
    $region17: #{tpu_custom_call.1} parent=1 // pred_fallthru
      _
    // Predicated region
    $region18: #{tpu_custom_call.1} parent=1 // pred_check
      _
    $region19: #{tpu_custom_call.1} parent=1 // pred_check_branch
      %54 = sbr.rel (0) target = $region21
    $region20: #{tpu_custom_call.1} parent=1 // pred_region
      _
    $region21: #{tpu_custom_call.1} parent=1 // pred_fallthru
      _
    // Predicated region
    $region22: #{tpu_custom_call.1} parent=1 // pred_check
      _
    $region23: #{tpu_custom_call.1} parent=1 // pred_check_branch
      %56 = sbr.rel (0) target = $region25
    $region24: #{tpu_custom_call.1} parent=1 // pred_region
      _
    $region25: #{tpu_custom_call.1} parent=1 // pred_fallthru
      _
    // Predicated region
    $region26: #{tpu_custom_call.1} parent=1 // pred_check
      _
    $region27: #{tpu_custom_call.1} parent=1 // pred_check_branch
      %58 = sbr.rel (0) target = $region29
    $region28: #{tpu_custom_call.1} parent=1 // pred_region
      _
    $region29: #{tpu_custom_call.1} parent=1 // pred_fallthru
      _
    // Predicated region
    $region30: #{tpu_custom_call.1} parent=1 // pred_check
      _
    $region31: #{tpu_custom_call.1} parent=1 // pred_check_branch
      %60 = sbr.rel (0) target = $region33
    $region32: #{tpu_custom_call.1} parent=1 // pred_region
      _
    $region33: #{tpu_custom_call.1} parent=1 // pred_fallthru
      _
    // Predicated region
    $region34: #{tpu_custom_call.1} parent=1 // pred_check
      _
    $region35: #{tpu_custom_call.1} parent=1 // pred_check_branch
      %62 = sbr.rel (0) target = $region37
    $region36: #{tpu_custom_call.1} parent=1 // pred_region
      %63 = dma.done [#allocation5], 16
    $region37: #{tpu_custom_call.1} parent=1 // pred_fallthru
      _
    // Predicated region
    $region38: #{tpu_custom_call.1} parent=1 // pred_check
      _
    $region39: #{tpu_custom_call.1} parent=1 // pred_check_branch
      %65 = sbr.rel (0) target = $region41
    $region40: #{tpu_custom_call.1} parent=1 // pred_region
      %66 = dma.done [#allocation3], 1024
    $region41: #{tpu_custom_call.1} parent=1 // pred_fallthru
      _
    // Predicated region
    $region42: #{tpu_custom_call.1} parent=1 // pred_check
      _
    $region43: #{tpu_custom_call.1} parent=1 // pred_check_branch
      %68 = sbr.rel (0) target = $region45
    $region44: #{tpu_custom_call.1} parent=1 // pred_region
      %69 = dma.done [#allocation8], 8192
    $region45: #{tpu_custom_call.1} parent=1 // pred_fallthru
      _
    %70 = sfence
    %v71 = vld [vmem:[%s2] sm:$0xf]
    %s72 = sld [smem:[#allocation2]]
    %s73 = sshra.s32 %s72, 3
    %s74 = sand.u32 %s72, 7
    %s75 = sshra.s32 %s72, 3
    %s76 = sand.u32 %s72, 7
    %s77 = smul.u32 %s73, 4
    %s78 = smul.u32 %s77, 8
    %s79 = sadd.s32 %s78, %s76
    %s80 = scalar_lea.vmem [#allocation6], %s79
    %v81 = vld [vmem:[%s80] ss:$8 sm:$0xf]
    %v82 = vxor.u32 %v81, 2147483648
    %v83 = vmul.f32 %v82, 1.442695
    %v84 = vpow.pop %v83
    %v85 = vadd.f32 %v84, 1.0
    %v86 = vrcp.pop %v85
    %v87 = vmul.f32 1.0, %v86
    %v88 = vtanh.pop %v81
    %v90 = vrot.slane %v87, 1
    %v92 = vmul.f32 %v90, 0.0
    %v94 = vrot.slane %v88, 2
    %v96 = vmul.f32 %v87, %v94
    %v97 = vadd.f32 %v92, %v96
    %v98 = vtanh.pop %v97
    %v99 = vrot.slane %v87, 3
    %v101 = vmul.f32 %v99, %v98
    %s102 = sld [smem:[#allocation2 + $0x1]]
    %s103 = sshra.s32 %s102, 3
    %s104 = sand.u32 %s102, 7
    %s105 = sshra.s32 %s102, 3
    %s106 = sand.u32 %s102, 7
    %s107 = smul.u32 %s103, 4
    %s108 = smul.u32 %s107, 8
    %s109 = sadd.s32 %s108, %s106
    %s110 = scalar_lea.vmem [#allocation6], %s109
    %v111 = vld [vmem:[%s110] ss:$8 sm:$0xf]
    %v112 = vadd.f32 %v111, %v71
    %v113 = vld [vmem:[#allocation7] sm:$0xff]
    %v114 = vld [vmem:[#allocation7 + $0x8] sm:$0xff]
    %v115 = vld [vmem:[#allocation7 + $0x10] sm:$0xff]
    %v116 = vld [vmem:[#allocation7 + $0x18] sm:$0xff]
    %v117 = vld [vmem:[#allocation7 + $0x20] sm:$0xff]
    %v118 = vld [vmem:[#allocation7 + $0x28] sm:$0xff]
    %v119 = vld [vmem:[#allocation7 + $0x30] sm:$0xff]
    %v120 = vld [vmem:[#allocation7 + $0x38] sm:$0xff]
    %v121 = vld [vmem:[#allocation7 + $0x40] sm:$0xff]
    %v122 = vld [vmem:[#allocation7 + $0x48] sm:$0xff]
    %v123 = vld [vmem:[#allocation7 + $0x50] sm:$0xff]
    %v124 = vld [vmem:[#allocation7 + $0x58] sm:$0xff]
    %v125 = vld [vmem:[#allocation7 + $0x60] sm:$0xff]
    %v126 = vld [vmem:[#allocation7 + $0x68] sm:$0xff]
    %v127 = vld [vmem:[#allocation7 + $0x70] sm:$0xff]
    %v128 = vld [vmem:[#allocation7 + $0x78] sm:$0xff]
    %v129 = vld [vmem:[#allocation7 + $0x80] sm:$0xff]
    %v130 = vld [vmem:[#allocation7 + $0x88] sm:$0xff]
    %v131 = vld [vmem:[#allocation7 + $0x90] sm:$0xff]
    %v132 = vld [vmem:[#allocation7 + $0x98] sm:$0xff]
    %v133 = vld [vmem:[#allocation7 + $0xa0] sm:$0xff]
    %v134 = vld [vmem:[#allocation7 + $0xa8] sm:$0xff]
    %v135 = vld [vmem:[#allocation7 + $0xb0] sm:$0xff]
    %v136 = vld [vmem:[#allocation7 + $0xb8] sm:$0xff]
    %v137 = vld [vmem:[#allocation7 + $0xc0] sm:$0xff]
    %v138 = vld [vmem:[#allocation7 + $0xc8] sm:$0xff]
    %v139 = vld [vmem:[#allocation7 + $0xd0] sm:$0xff]
    %v140 = vld [vmem:[#allocation7 + $0xd8] sm:$0xff]
    %v141 = vld [vmem:[#allocation7 + $0xe0] sm:$0xff]
    %v142 = vld [vmem:[#allocation7 + $0xe8] sm:$0xff]
    %v143 = vld [vmem:[#allocation7 + $0xf0] sm:$0xff]
    %v144 = vld [vmem:[#allocation7 + $0xf8] sm:$0xff]
    %v145 = vld [vmem:[#allocation7 + $0x100] sm:$0xff]
    %v146 = vld [vmem:[#allocation7 + $0x108] sm:$0xff]
    %v147 = vld [vmem:[#allocation7 + $0x110] sm:$0xff]
    %v148 = vld [vmem:[#allocation7 + $0x118] sm:$0xff]
    %v149 = vld [vmem:[#allocation7 + $0x120] sm:$0xff]
    %v150 = vld [vmem:[#allocation7 + $0x128] sm:$0xff]
    %v151 = vld [vmem:[#allocation7 + $0x130] sm:$0xff]
    %v152 = vld [vmem:[#allocation7 + $0x138] sm:$0xff]
    %v153 = vld [vmem:[#allocation7 + $0x140] sm:$0xff]
    %v154 = vld [vmem:[#allocation7 + $0x148] sm:$0xff]
    %v155 = vld [vmem:[#allocation7 + $0x150] sm:$0xff]
    %v156 = vld [vmem:[#allocation7 + $0x158] sm:$0xff]
    %v157 = vld [vmem:[#allocation7 + $0x160] sm:$0xff]
    %v158 = vld [vmem:[#allocation7 + $0x168] sm:$0xff]
    %v159 = vld [vmem:[#allocation7 + $0x170] sm:$0xff]
    %v160 = vld [vmem:[#allocation7 + $0x178] sm:$0xff]
    %v161 = vld [vmem:[#allocation7 + $0x180] sm:$0xff]
    %v162 = vld [vmem:[#allocation7 + $0x188] sm:$0xff]
    %v163 = vld [vmem:[#allocation7 + $0x190] sm:$0xff]
    %v164 = vld [vmem:[#allocation7 + $0x198] sm:$0xff]
    %v165 = vld [vmem:[#allocation7 + $0x1a0] sm:$0xff]
    %v166 = vld [vmem:[#allocation7 + $0x1a8] sm:$0xff]
    %v167 = vld [vmem:[#allocation7 + $0x1b0] sm:$0xff]
    %v168 = vld [vmem:[#allocation7 + $0x1b8] sm:$0xff]
    %v169 = vld [vmem:[#allocation7 + $0x1c0] sm:$0xff]
    %v170 = vld [vmem:[#allocation7 + $0x1c8] sm:$0xff]
    %v171 = vld [vmem:[#allocation7 + $0x1d0] sm:$0xff]
    %v172 = vld [vmem:[#allocation7 + $0x1d8] sm:$0xff]
    %v173 = vld [vmem:[#allocation7 + $0x1e0] sm:$0xff]
    %v174 = vld [vmem:[#allocation7 + $0x1e8] sm:$0xff]
    %v175 = vld [vmem:[#allocation7 + $0x1f0] sm:$0xff]
    %v176 = vld [vmem:[#allocation7 + $0x1f8] sm:$0xff]
    %v178 = vlaneseq
    %v179 = vshrl.u32 %v178, 7
    %v180 = vsub.s32 0, %v179
    %v181 = vrot.slane %v112, %v180
    %v182 = vlaneseq
    %v183 = vshrl.u32 %v182, 7
    %v184 = vsub.s32 1, %v183
    %v185 = vrot.slane %v112, %v184
    %v186 = vlaneseq
    %v187 = vshrl.u32 %v186, 7
    %v188 = vsub.s32 2, %v187
    %v189 = vrot.slane %v112, %v188
    %v190 = vlaneseq
    %v191 = vshrl.u32 %v190, 7
    %v192 = vsub.s32 3, %v191
    %v193 = vrot.slane %v112, %v192
    %198 = vmatprep.subr.mxu0 %v114
    %199 = vmatpush1.msra.mxu0 %v113
    %200 = vmatprep.subr.mxu0 %v118
    %201 = vmatpush1.msra.mxu0 %v117
    %202 = vmatprep.subr.mxu0 %v122
    %203 = vmatpush1.msra.mxu0 %v121
    %204 = vmatprep.subr.mxu0 %v126
    %205 = vmatpush1.msra.mxu0 %v125
    %206 = vmatprep.subr.mxu0 %v130
    %207 = vmatpush1.msra.mxu0 %v129
    %208 = vmatprep.subr.mxu0 %v134
    %209 = vmatpush1.msra.mxu0 %v133
    %210 = vmatprep.subr.mxu0 %v138
    %211 = vmatpush1.msra.mxu0 %v137
    %212 = vmatprep.subr.mxu0 %v142
    %213 = vmatpush1.msra.mxu0 %v141
    %214 = vmatprep.subr.mxu0 %v146
    %215 = vmatpush1.msra.mxu0 %v145
    %216 = vmatprep.subr.mxu0 %v150
    %217 = vmatpush1.msra.mxu0 %v149
    %218 = vmatprep.subr.mxu0 %v154
    %219 = vmatpush1.msra.mxu0 %v153
    %220 = vmatprep.subr.mxu0 %v158
    %221 = vmatpush1.msra.mxu0 %v157
    %222 = vmatprep.subr.mxu0 %v162
    %223 = vmatpush1.msra.mxu0 %v161
    %224 = vmatprep.subr.mxu0 %v166
    %225 = vmatpush1.msra.mxu0 %v165
    %226 = vmatprep.subr.mxu0 %v170
    %227 = vmatpush1.msra.mxu0 %v169
    %228 = vmatprep.subr.mxu0 %v174
    %229 = vmatpush1.msra.mxu0 %v173
    %230 = vmatprep.subr.mxu0 0.0
    %231 = vmatpush1.msra.mxu0 0.0
    %232 = vmatprep.subr.mxu0 0.0
    %233 = vmatpush1.msra.mxu0 0.0
    %234 = vmatprep.subr.mxu0 0.0
    %235 = vmatpush1.msra.mxu0 0.0
    %236 = vmatprep.subr.mxu0 0.0
    %237 = vmatpush1.msra.mxu0 0.0
    %238 = vmatprep.subr.mxu0 0.0
    %239 = vmatpush1.msra.mxu0 0.0
    %240 = vmatprep.subr.mxu0 0.0
    %241 = vmatpush1.msra.mxu0 0.0
    %242 = vmatprep.subr.mxu0 0.0
    %243 = vmatpush1.msra.mxu0 0.0
    %244 = vmatprep.subr.mxu0 0.0
    %245 = vmatpush1.msra.mxu0 0.0
    %246 = vmatprep.subr.mxu0 0.0
    %247 = vmatpush1.msra.mxu0 0.0
    %248 = vmatprep.subr.mxu0 0.0
    %249 = vmatpush1.msra.mxu0 0.0
    %250 = vmatprep.subr.mxu0 0.0
    %251 = vmatpush1.msra.mxu0 0.0
    %252 = vmatprep.subr.mxu0 0.0
    %253 = vmatpush1.msra.mxu0 0.0
    %254 = vmatprep.subr.mxu0 0.0
    %255 = vmatpush1.msra.mxu0 0.0
    %256 = vmatprep.subr.mxu0 0.0
    %257 = vmatpush1.msra.mxu0 0.0
    %258 = vmatprep.subr.mxu0 0.0
    %259 = vmatpush1.msra.mxu0 0.0
    %260 = vmatprep.subr.mxu0 0.0
    %261 = vmatpush1.msra.mxu0 0.0
    %262 = vmatprep.mubr.f32.mxu0 0.0
    %263 = vmatmul.mubr.f32.gmra.mrb[0].mxu0 %v101
    %v264 = vpop.f32.mrb[0].mxu0
    %v265 = vadd.f32 %v181, %v264
    %v266 = vpop.f32.mrb[0].mxu0
    %v267 = vadd.f32 %v185, %v266
    %268 = vdwg.mxu0
    %269 = vmatprep.subr.mxu0 %v116
    %270 = vmatpush1.msra.mxu0 %v115
    %271 = vmatprep.subr.mxu0 %v120
    %272 = vmatpush1.msra.mxu0 %v119
    %273 = vmatprep.subr.mxu0 %v124
    %274 = vmatpush1.msra.mxu0 %v123
    %275 = vmatprep.subr.mxu0 %v128
    %276 = vmatpush1.msra.mxu0 %v127
    %277 = vmatprep.subr.mxu0 %v132
    %278 = vmatpush1.msra.mxu0 %v131
    %279 = vmatprep.subr.mxu0 %v136
    %280 = vmatpush1.msra.mxu0 %v135
    %281 = vmatprep.subr.mxu0 %v140
    %282 = vmatpush1.msra.mxu0 %v139
    %283 = vmatprep.subr.mxu0 %v144
    %284 = vmatpush1.msra.mxu0 %v143
    %285 = vmatprep.subr.mxu0 %v148
    %286 = vmatpush1.msra.mxu0 %v147
    %287 = vmatprep.subr.mxu0 %v152
    %288 = vmatpush1.msra.mxu0 %v151
    %289 = vmatprep.subr.mxu0 %v156
    %290 = vmatpush1.msra.mxu0 %v155
    %291 = vmatprep.subr.mxu0 %v160
    %292 = vmatpush1.msra.mxu0 %v159
    %293 = vmatprep.subr.mxu0 %v164
    %294 = vmatpush1.msra.mxu0 %v163
    %295 = vmatprep.subr.mxu0 %v168
    %296 = vmatpush1.msra.mxu0 %v167
    %297 = vmatprep.subr.mxu0 %v172
    %298 = vmatpush1.msra.mxu0 %v171
    %299 = vmatprep.subr.mxu0 %v176
    %300 = vmatpush1.msra.mxu0 %v175
    %301 = vmatprep.subr.mxu0 0.0
    %302 = vmatpush1.msra.mxu0 0.0
    %303 = vmatprep.subr.mxu0 0.0
    %304 = vmatpush1.msra.mxu0 0.0
    %305 = vmatprep.subr.mxu0 0.0
    %306 = vmatpush1.msra.mxu0 0.0
    %307 = vmatprep.subr.mxu0 0.0
    %308 = vmatpush1.msra.mxu0 0.0
    %309 = vmatprep.subr.mxu0 0.0
    %310 = vmatpush1.msra.mxu0 0.0
    %311 = vmatprep.subr.mxu0 0.0
    %312 = vmatpush1.msra.mxu0 0.0
    %313 = vmatprep.subr.mxu0 0.0
    %314 = vmatpush1.msra.mxu0 0.0
    %315 = vmatprep.subr.mxu0 0.0
    %316 = vmatpush1.msra.mxu0 0.0
    %317 = vmatprep.subr.mxu0 0.0
    %318 = vmatpush1.msra.mxu0 0.0
    %319 = vmatprep.subr.mxu0 0.0
    %320 = vmatpush1.msra.mxu0 0.0
    %321 = vmatprep.subr.mxu0 0.0
    %322 = vmatpush1.msra.mxu0 0.0
    %323 = vmatprep.subr.mxu0 0.0
    %324 = vmatpush1.msra.mxu0 0.0
    %325 = vmatprep.subr.mxu0 0.0
    %326 = vmatpush1.msra.mxu0 0.0
    %327 = vmatprep.subr.mxu0 0.0
    %328 = vmatpush1.msra.mxu0 0.0
    %329 = vmatprep.subr.mxu0 0.0
    %330 = vmatpush1.msra.mxu0 0.0
    %331 = vmatprep.subr.mxu0 0.0
    %332 = vmatpush1.msra.mxu0 0.0
    %333 = vmatprep.mubr.f32.mxu0 0.0
    %334 = vmatmul.mubr.f32.gmra.mrb[0].mxu0 %v101
    %v335 = vpop.f32.mrb[0].mxu0
    %v336 = vadd.f32 %v189, %v335
    %v337 = vpop.f32.mrb[0].mxu0
    %v338 = vadd.f32 %v193, %v337
    %339 = vdwg.mxu0
    %v340 = vxor.u32 %v265, 2147483648
    %v341 = vxor.u32 %v267, 2147483648
    %v342 = vxor.u32 %v338, 2147483648
    %v343 = vmul.f32 %v340, 1.442695
    %v344 = vpow.pop %v343
    %v345 = vmul.f32 %v341, 1.442695
    %v346 = vpow.pop %v345
    %v347 = vmul.f32 %v342, 1.442695
    %v348 = vpow.pop %v347
    %v349 = vadd.f32 %v344, 1.0
    %v350 = vadd.f32 %v346, 1.0
    %v351 = vadd.f32 %v348, 1.0
    %v352 = vrcp.pop %v349
    %v353 = vmul.f32 1.0, %v352
    %v354 = vrcp.pop %v350
    %v355 = vmul.f32 1.0, %v354
    %v356 = vrcp.pop %v351
    %v357 = vmul.f32 1.0, %v356
    %v358 = vtanh.pop %v336
    %v359 = vmul.f32 %v355, %v97
    %v360 = vmul.f32 %v353, %v358
    %v361 = vadd.f32 %v359, %v360
    %v362 = vtanh.pop %v361
    %v363 = vmul.f32 %v357, %v362
    %s364 = sld [smem:[#allocation2 + $0x2]]
    %s365 = sshra.s32 %s364, 3
    %s366 = sand.u32 %s364, 7
    %s367 = sshra.s32 %s364, 3
    %s368 = sand.u32 %s364, 7
    %s369 = smul.u32 %s365, 4
    %s370 = smul.u32 %s369, 8
    %s371 = sadd.s32 %s370, %s368
    %s372 = scalar_lea.vmem [#allocation6], %s371
    %v373 = vld [vmem:[%s372] ss:$8 sm:$0xf]
    %v374 = vadd.f32 %v373, %v71
    %v376 = vlaneseq
    %v377 = vshrl.u32 %v376, 7
    %v378 = vsub.s32 0, %v377
    %v379 = vrot.slane %v374, %v378
    %v380 = vlaneseq
    %v381 = vshrl.u32 %v380, 7
    %v382 = vsub.s32 1, %v381
    %v383 = vrot.slane %v374, %v382
    %v384 = vlaneseq
    %v385 = vshrl.u32 %v384, 7
    %v386 = vsub.s32 2, %v385
    %v387 = vrot.slane %v374, %v386
    %v388 = vlaneseq
    %v389 = vshrl.u32 %v388, 7
    %v390 = vsub.s32 3, %v389
    %v391 = vrot.slane %v374, %v390
    %396 = vmatprep.subr.mxu0 %v114
    %397 = vmatpush1.msra.mxu0 %v113
    %398 = vmatprep.subr.mxu0 %v118
    %399 = vmatpush1.msra.mxu0 %v117
    %400 = vmatprep.subr.mxu0 %v122
    %401 = vmatpush1.msra.mxu0 %v121
    %402 = vmatprep.subr.mxu0 %v126
    %403 = vmatpush1.msra.mxu0 %v125
    %404 = vmatprep.subr.mxu0 %v130
    %405 = vmatpush1.msra.mxu0 %v129
    %406 = vmatprep.subr.mxu0 %v134
    %407 = vmatpush1.msra.mxu0 %v133
    %408 = vmatprep.subr.mxu0 %v138
    %409 = vmatpush1.msra.mxu0 %v137
    %410 = vmatprep.subr.mxu0 %v142
    %411 = vmatpush1.msra.mxu0 %v141
    %412 = vmatprep.subr.mxu0 %v146
    %413 = vmatpush1.msra.mxu0 %v145
    %414 = vmatprep.subr.mxu0 %v150
    %415 = vmatpush1.msra.mxu0 %v149
    %416 = vmatprep.subr.mxu0 %v154
    %417 = vmatpush1.msra.mxu0 %v153
    %418 = vmatprep.subr.mxu0 %v158
    %419 = vmatpush1.msra.mxu0 %v157
    %420 = vmatprep.subr.mxu0 %v162
    %421 = vmatpush1.msra.mxu0 %v161
    %422 = vmatprep.subr.mxu0 %v166
    %423 = vmatpush1.msra.mxu0 %v165
    %424 = vmatprep.subr.mxu0 %v170
    %425 = vmatpush1.msra.mxu0 %v169
    %426 = vmatprep.subr.mxu0 %v174
    %427 = vmatpush1.msra.mxu0 %v173
    %428 = vmatprep.subr.mxu0 0.0
    %429 = vmatpush1.msra.mxu0 0.0
    %430 = vmatprep.subr.mxu0 0.0
    %431 = vmatpush1.msra.mxu0 0.0
    %432 = vmatprep.subr.mxu0 0.0
    %433 = vmatpush1.msra.mxu0 0.0
    %434 = vmatprep.subr.mxu0 0.0
    %435 = vmatpush1.msra.mxu0 0.0
    %436 = vmatprep.subr.mxu0 0.0
    %437 = vmatpush1.msra.mxu0 0.0
    %438 = vmatprep.subr.mxu0 0.0
    %439 = vmatpush1.msra.mxu0 0.0
    %440 = vmatprep.subr.mxu0 0.0
    %441 = vmatpush1.msra.mxu0 0.0
    %442 = vmatprep.subr.mxu0 0.0
    %443 = vmatpush1.msra.mxu0 0.0
    %444 = vmatprep.subr.mxu0 0.0
    %445 = vmatpush1.msra.mxu0 0.0
    %446 = vmatprep.subr.mxu0 0.0
    %447 = vmatpush1.msra.mxu0 0.0
    %448 = vmatprep.subr.mxu0 0.0
    %449 = vmatpush1.msra.mxu0 0.0
    %450 = vmatprep.subr.mxu0 0.0
    %451 = vmatpush1.msra.mxu0 0.0
    %452 = vmatprep.subr.mxu0 0.0
    %453 = vmatpush1.msra.mxu0 0.0
    %454 = vmatprep.subr.mxu0 0.0
    %455 = vmatpush1.msra.mxu0 0.0
    %456 = vmatprep.subr.mxu0 0.0
    %457 = vmatpush1.msra.mxu0 0.0
    %458 = vmatprep.subr.mxu0 0.0
    %459 = vmatpush1.msra.mxu0 0.0
    %460 = vmatprep.mubr.f32.mxu0 0.0
    %461 = vmatmul.mubr.f32.gmra.mrb[0].mxu0 %v363
    %v462 = vpop.f32.mrb[0].mxu0
    %v463 = vadd.f32 %v379, %v462
    %v464 = vpop.f32.mrb[0].mxu0
    %v465 = vadd.f32 %v383, %v464
    %466 = vdwg.mxu0
    %467 = vmatprep.subr.mxu0 %v116
    %468 = vmatpush1.msra.mxu0 %v115
    %469 = vmatprep.subr.mxu0 %v120
    %470 = vmatpush1.msra.mxu0 %v119
    %471 = vmatprep.subr.mxu0 %v124
    %472 = vmatpush1.msra.mxu0 %v123
    %473 = vmatprep.subr.mxu0 %v128
    %474 = vmatpush1.msra.mxu0 %v127
    %475 = vmatprep.subr.mxu0 %v132
    %476 = vmatpush1.msra.mxu0 %v131
    %477 = vmatprep.subr.mxu0 %v136
    %478 = vmatpush1.msra.mxu0 %v135
    %479 = vmatprep.subr.mxu0 %v140
    %480 = vmatpush1.msra.mxu0 %v139
    %481 = vmatprep.subr.mxu0 %v144
    %482 = vmatpush1.msra.mxu0 %v143
    %483 = vmatprep.subr.mxu0 %v148
    %484 = vmatpush1.msra.mxu0 %v147
    %485 = vmatprep.subr.mxu0 %v152
    %486 = vmatpush1.msra.mxu0 %v151
    %487 = vmatprep.subr.mxu0 %v156
    %488 = vmatpush1.msra.mxu0 %v155
    %489 = vmatprep.subr.mxu0 %v160
    %490 = vmatpush1.msra.mxu0 %v159
    %491 = vmatprep.subr.mxu0 %v164
    %492 = vmatpush1.msra.mxu0 %v163
    %493 = vmatprep.subr.mxu0 %v168
    %494 = vmatpush1.msra.mxu0 %v167
    %495 = vmatprep.subr.mxu0 %v172
    %496 = vmatpush1.msra.mxu0 %v171
    %497 = vmatprep.subr.mxu0 %v176
    %498 = vmatpush1.msra.mxu0 %v175
    %499 = vmatprep.subr.mxu0 0.0
    %500 = vmatpush1.msra.mxu0 0.0
    %501 = vmatprep.subr.mxu0 0.0
    %502 = vmatpush1.msra.mxu0 0.0
    %503 = vmatprep.subr.mxu0 0.0
    %504 = vmatpush1.msra.mxu0 0.0
    %505 = vmatprep.subr.mxu0 0.0
    %506 = vmatpush1.msra.mxu0 0.0
    %507 = vmatprep.subr.mxu0 0.0
    %508 = vmatpush1.msra.mxu0 0.0
    %509 = vmatprep.subr.mxu0 0.0
    %510 = vmatpush1.msra.mxu0 0.0
    %511 = vmatprep.subr.mxu0 0.0
    %512 = vmatpush1.msra.mxu0 0.0
    %513 = vmatprep.subr.mxu0 0.0
    %514 = vmatpush1.msra.mxu0 0.0
    %515 = vmatprep.subr.mxu0 0.0
    %516 = vmatpush1.msra.mxu0 0.0
    %517 = vmatprep.subr.mxu0 0.0
    %518 = vmatpush1.msra.mxu0 0.0
    %519 = vmatprep.subr.mxu0 0.0
    %520 = vmatpush1.msra.mxu0 0.0
    %521 = vmatprep.subr.mxu0 0.0
    %522 = vmatpush1.msra.mxu0 0.0
    %523 = vmatprep.subr.mxu0 0.0
    %524 = vmatpush1.msra.mxu0 0.0
    %525 = vmatprep.subr.mxu0 0.0
    %526 = vmatpush1.msra.mxu0 0.0
    %527 = vmatprep.subr.mxu0 0.0
    %528 = vmatpush1.msra.mxu0 0.0
    %529 = vmatprep.subr.mxu0 0.0
    %530 = vmatpush1.msra.mxu0 0.0
    %531 = vmatprep.mubr.f32.mxu0 0.0
    %532 = vmatmul.mubr.f32.gmra.mrb[0].mxu0 %v363
    %v533 = vpop.f32.mrb[0].mxu0
    %v534 = vadd.f32 %v387, %v533
    %v535 = vpop.f32.mrb[0].mxu0
    %v536 = vadd.f32 %v391, %v535
    %537 = vdwg.mxu0
    %v538 = vxor.u32 %v463, 2147483648
    %v539 = vxor.u32 %v465, 2147483648
    %v540 = vxor.u32 %v536, 2147483648
    %v541 = vmul.f32 %v538, 1.442695
    %v542 = vpow.pop %v541
    %v543 = vmul.f32 %v539, 1.442695
    %v544 = vpow.pop %v543
    %v545 = vmul.f32 %v540, 1.442695
    %v546 = vpow.pop %v545
    %v547 = vadd.f32 %v542, 1.0
    %v548 = vadd.f32 %v544, 1.0
    %v549 = vadd.f32 %v546, 1.0
    %v550 = vrcp.pop %v547
    %v551 = vmul.f32 1.0, %v550
    %v552 = vrcp.pop %v548
    %v553 = vmul.f32 1.0, %v552
    %v554 = vrcp.pop %v549
    %v555 = vmul.f32 1.0, %v554
    %v556 = vtanh.pop %v534
    %v557 = vmul.f32 %v553, %v361
    %v558 = vmul.f32 %v551, %v556
    %v559 = vadd.f32 %v557, %v558
    %v560 = vtanh.pop %v559
    %v561 = vmul.f32 %v555, %v560
    %s562 = sld [smem:[#allocation2 + $0x3]]
    %s563 = sshra.s32 %s562, 3
    %s564 = sand.u32 %s562, 7
    %s565 = sshra.s32 %s562, 3
    %s566 = sand.u32 %s562, 7
    %s567 = smul.u32 %s563, 4
    %s568 = smul.u32 %s567, 8
    %s569 = sadd.s32 %s568, %s566
    %s570 = scalar_lea.vmem [#allocation6], %s569
    %v571 = vld [vmem:[%s570] ss:$8 sm:$0xf]
    %v572 = vadd.f32 %v571, %v71
    %v574 = vlaneseq
    %v575 = vshrl.u32 %v574, 7
    %v576 = vsub.s32 0, %v575
    %v577 = vrot.slane %v572, %v576
    %v578 = vlaneseq
    %v579 = vshrl.u32 %v578, 7
    %v580 = vsub.s32 1, %v579
    %v581 = vrot.slane %v572, %v580
    %v582 = vlaneseq
    %v583 = vshrl.u32 %v582, 7
    %v584 = vsub.s32 2, %v583
    %v585 = vrot.slane %v572, %v584
    %v586 = vlaneseq
    %v587 = vshrl.u32 %v586, 7
    %v588 = vsub.s32 3, %v587
    %v589 = vrot.slane %v572, %v588
    %594 = vmatprep.subr.mxu0 %v114
    %595 = vmatpush1.msra.mxu0 %v113
    %596 = vmatprep.subr.mxu0 %v118
    %597 = vmatpush1.msra.mxu0 %v117
    %598 = vmatprep.subr.mxu0 %v122
    %599 = vmatpush1.msra.mxu0 %v121
    %600 = vmatprep.subr.mxu0 %v126
    %601 = vmatpush1.msra.mxu0 %v125
    %602 = vmatprep.subr.mxu0 %v130
    %603 = vmatpush1.msra.mxu0 %v129
    %604 = vmatprep.subr.mxu0 %v134
    %605 = vmatpush1.msra.mxu0 %v133
    %606 = vmatprep.subr.mxu0 %v138
    %607 = vmatpush1.msra.mxu0 %v137
    %608 = vmatprep.subr.mxu0 %v142
    %609 = vmatpush1.msra.mxu0 %v141
    %610 = vmatprep.subr.mxu0 %v146
    %611 = vmatpush1.msra.mxu0 %v145
    %612 = vmatprep.subr.mxu0 %v150
    %613 = vmatpush1.msra.mxu0 %v149
    %614 = vmatprep.subr.mxu0 %v154
    %615 = vmatpush1.msra.mxu0 %v153
    %616 = vmatprep.subr.mxu0 %v158
    %617 = vmatpush1.msra.mxu0 %v157
    %618 = vmatprep.subr.mxu0 %v162
    %619 = vmatpush1.msra.mxu0 %v161
    %620 = vmatprep.subr.mxu0 %v166
    %621 = vmatpush1.msra.mxu0 %v165
    %622 = vmatprep.subr.mxu0 %v170
    %623 = vmatpush1.msra.mxu0 %v169
    %624 = vmatprep.subr.mxu0 %v174
    %625 = vmatpush1.msra.mxu0 %v173
    %626 = vmatprep.subr.mxu0 0.0
    %627 = vmatpush1.msra.mxu0 0.0
    %628 = vmatprep.subr.mxu0 0.0
    %629 = vmatpush1.msra.mxu0 0.0
    %630 = vmatprep.subr.mxu0 0.0
    %631 = vmatpush1.msra.mxu0 0.0
    %632 = vmatprep.subr.mxu0 0.0
    %633 = vmatpush1.msra.mxu0 0.0
    %634 = vmatprep.subr.mxu0 0.0
    %635 = vmatpush1.msra.mxu0 0.0
    %636 = vmatprep.subr.mxu0 0.0
    %637 = vmatpush1.msra.mxu0 0.0
    %638 = vmatprep.subr.mxu0 0.0
    %639 = vmatpush1.msra.mxu0 0.0
    %640 = vmatprep.subr.mxu0 0.0
    %641 = vmatpush1.msra.mxu0 0.0
    %642 = vmatprep.subr.mxu0 0.0
    %643 = vmatpush1.msra.mxu0 0.0
    %644 = vmatprep.subr.mxu0 0.0
    %645 = vmatpush1.msra.mxu0 0.0
    %646 = vmatprep.subr.mxu0 0.0
    %647 = vmatpush1.msra.mxu0 0.0
    %648 = vmatprep.subr.mxu0 0.0
    %649 = vmatpush1.msra.mxu0 0.0
    %650 = vmatprep.subr.mxu0 0.0
    %651 = vmatpush1.msra.mxu0 0.0
    %652 = vmatprep.subr.mxu0 0.0
    %653 = vmatpush1.msra.mxu0 0.0
    %654 = vmatprep.subr.mxu0 0.0
    %655 = vmatpush1.msra.mxu0 0.0
    %656 = vmatprep.subr.mxu0 0.0
    %657 = vmatpush1.msra.mxu0 0.0
    %658 = vmatprep.mubr.f32.mxu0 0.0
    %659 = vmatmul.mubr.f32.gmra.mrb[0].mxu0 %v561
    %v660 = vpop.f32.mrb[0].mxu0
    %v661 = vadd.f32 %v577, %v660
    %v662 = vpop.f32.mrb[0].mxu0
    %v663 = vadd.f32 %v581, %v662
    %664 = vdwg.mxu0
    %665 = vmatprep.subr.mxu0 %v116
    %666 = vmatpush1.msra.mxu0 %v115
    %667 = vmatprep.subr.mxu0 %v120
    %668 = vmatpush1.msra.mxu0 %v119
    %669 = vmatprep.subr.mxu0 %v124
    %670 = vmatpush1.msra.mxu0 %v123
    %671 = vmatprep.subr.mxu0 %v128
    %672 = vmatpush1.msra.mxu0 %v127
    %673 = vmatprep.subr.mxu0 %v132
    %674 = vmatpush1.msra.mxu0 %v131
    %675 = vmatprep.subr.mxu0 %v136
    %676 = vmatpush1.msra.mxu0 %v135
    %677 = vmatprep.subr.mxu0 %v140
    %678 = vmatpush1.msra.mxu0 %v139
    %679 = vmatprep.subr.mxu0 %v144
    %680 = vmatpush1.msra.mxu0 %v143
    %681 = vmatprep.subr.mxu0 %v148
    %682 = vmatpush1.msra.mxu0 %v147
    %683 = vmatprep.subr.mxu0 %v152
    %684 = vmatpush1.msra.mxu0 %v151
    %685 = vmatprep.subr.mxu0 %v156
    %686 = vmatpush1.msra.mxu0 %v155
    %687 = vmatprep.subr.mxu0 %v160
    %688 = vmatpush1.msra.mxu0 %v159
    %689 = vmatprep.subr.mxu0 %v164
    %690 = vmatpush1.msra.mxu0 %v163
    %691 = vmatprep.subr.mxu0 %v168
    %692 = vmatpush1.msra.mxu0 %v167
    %693 = vmatprep.subr.mxu0 %v172
    %694 = vmatpush1.msra.mxu0 %v171
    %695 = vmatprep.subr.mxu0 %v176
    %696 = vmatpush1.msra.mxu0 %v175
    %697 = vmatprep.subr.mxu0 0.0
    %698 = vmatpush1.msra.mxu0 0.0
    %699 = vmatprep.subr.mxu0 0.0
    %700 = vmatpush1.msra.mxu0 0.0
    %701 = vmatprep.subr.mxu0 0.0
    %702 = vmatpush1.msra.mxu0 0.0
    %703 = vmatprep.subr.mxu0 0.0
    %704 = vmatpush1.msra.mxu0 0.0
    %705 = vmatprep.subr.mxu0 0.0
    %706 = vmatpush1.msra.mxu0 0.0
    %707 = vmatprep.subr.mxu0 0.0
    %708 = vmatpush1.msra.mxu0 0.0
    %709 = vmatprep.subr.mxu0 0.0
    %710 = vmatpush1.msra.mxu0 0.0
    %711 = vmatprep.subr.mxu0 0.0
    %712 = vmatpush1.msra.mxu0 0.0
    %713 = vmatprep.subr.mxu0 0.0
    %714 = vmatpush1.msra.mxu0 0.0
    %715 = vmatprep.subr.mxu0 0.0
    %716 = vmatpush1.msra.mxu0 0.0
    %717 = vmatprep.subr.mxu0 0.0
    %718 = vmatpush1.msra.mxu0 0.0
    %719 = vmatprep.subr.mxu0 0.0
    %720 = vmatpush1.msra.mxu0 0.0
    %721 = vmatprep.subr.mxu0 0.0
    %722 = vmatpush1.msra.mxu0 0.0
    %723 = vmatprep.subr.mxu0 0.0
    %724 = vmatpush1.msra.mxu0 0.0
    %725 = vmatprep.subr.mxu0 0.0
    %726 = vmatpush1.msra.mxu0 0.0
    %727 = vmatprep.subr.mxu0 0.0
    %728 = vmatpush1.msra.mxu0 0.0
    %729 = vmatprep.mubr.f32.mxu0 0.0
    %730 = vmatmul.mubr.f32.gmra.mrb[0].mxu0 %v561
    %v731 = vpop.f32.mrb[0].mxu0
    %v732 = vadd.f32 %v585, %v731
    %v733 = vpop.f32.mrb[0].mxu0
    %v734 = vadd.f32 %v589, %v733
    %735 = vdwg.mxu0
    %v736 = vxor.u32 %v661, 2147483648
    %v737 = vxor.u32 %v663, 2147483648
    %v738 = vxor.u32 %v734, 2147483648
    %v739 = vmul.f32 %v736, 1.442695
    %v740 = vpow.pop %v739
    %v741 = vmul.f32 %v737, 1.442695
    %v742 = vpow.pop %v741
    %v743 = vmul.f32 %v738, 1.442695
    %v744 = vpow.pop %v743
    %v745 = vadd.f32 %v740, 1.0
    %v746 = vadd.f32 %v742, 1.0
    %v747 = vadd.f32 %v744, 1.0
    %v748 = vrcp.pop %v745
    %v749 = vmul.f32 1.0, %v748
    %v750 = vrcp.pop %v746
    %v751 = vmul.f32 1.0, %v750
    %v752 = vrcp.pop %v747
    %v753 = vmul.f32 1.0, %v752
    %v754 = vtanh.pop %v732
    %v755 = vmul.f32 %v751, %v559
    %v756 = vmul.f32 %v749, %v754
    %v757 = vadd.f32 %v755, %v756
    %v758 = vtanh.pop %v757
    %v759 = vmul.f32 %v753, %v758
    %s760 = sld [smem:[#allocation2 + $0x4]]
    %s761 = sshra.s32 %s760, 3
    %s762 = sand.u32 %s760, 7
    %s763 = sshra.s32 %s760, 3
    %s764 = sand.u32 %s760, 7
    %s765 = smul.u32 %s761, 4
    %s766 = smul.u32 %s765, 8
    %s767 = sadd.s32 %s766, %s764
    %s768 = scalar_lea.vmem [#allocation6], %s767
    %v769 = vld [vmem:[%s768] ss:$8 sm:$0xf]
    %v770 = vadd.f32 %v769, %v71
    %v772 = vlaneseq
    %v773 = vshrl.u32 %v772, 7
    %v774 = vsub.s32 0, %v773
    %v775 = vrot.slane %v770, %v774
    %v776 = vlaneseq
    %v777 = vshrl.u32 %v776, 7
    %v778 = vsub.s32 1, %v777
    %v779 = vrot.slane %v770, %v778
    %v780 = vlaneseq
    %v781 = vshrl.u32 %v780, 7
    %v782 = vsub.s32 2, %v781
    %v783 = vrot.slane %v770, %v782
    %v784 = vlaneseq
    %v785 = vshrl.u32 %v784, 7
    %v786 = vsub.s32 3, %v785
    %v787 = vrot.slane %v770, %v786
    %792 = vmatprep.subr.mxu0 %v114
    %793 = vmatpush1.msra.mxu0 %v113
    %794 = vmatprep.subr.mxu0 %v118
    %795 = vmatpush1.msra.mxu0 %v117
    %796 = vmatprep.subr.mxu0 %v122
    %797 = vmatpush1.msra.mxu0 %v121
    %798 = vmatprep.subr.mxu0 %v126
    %799 = vmatpush1.msra.mxu0 %v125
    %800 = vmatprep.subr.mxu0 %v130
    %801 = vmatpush1.msra.mxu0 %v129
    %802 = vmatprep.subr.mxu0 %v134
    %803 = vmatpush1.msra.mxu0 %v133
    %804 = vmatprep.subr.mxu0 %v138
    %805 = vmatpush1.msra.mxu0 %v137
    %806 = vmatprep.subr.mxu0 %v142
    %807 = vmatpush1.msra.mxu0 %v141
    %808 = vmatprep.subr.mxu0 %v146
    %809 = vmatpush1.msra.mxu0 %v145
    %810 = vmatprep.subr.mxu0 %v150
    %811 = vmatpush1.msra.mxu0 %v149
    %812 = vmatprep.subr.mxu0 %v154
    %813 = vmatpush1.msra.mxu0 %v153
    %814 = vmatprep.subr.mxu0 %v158
    %815 = vmatpush1.msra.mxu0 %v157
    %816 = vmatprep.subr.mxu0 %v162
    %817 = vmatpush1.msra.mxu0 %v161
    %818 = vmatprep.subr.mxu0 %v166
    %819 = vmatpush1.msra.mxu0 %v165
    %820 = vmatprep.subr.mxu0 %v170
    %821 = vmatpush1.msra.mxu0 %v169
    %822 = vmatprep.subr.mxu0 %v174
    %823 = vmatpush1.msra.mxu0 %v173
    %824 = vmatprep.subr.mxu0 0.0
    %825 = vmatpush1.msra.mxu0 0.0
    %826 = vmatprep.subr.mxu0 0.0
    %827 = vmatpush1.msra.mxu0 0.0
    %828 = vmatprep.subr.mxu0 0.0
    %829 = vmatpush1.msra.mxu0 0.0
    %830 = vmatprep.subr.mxu0 0.0
    %831 = vmatpush1.msra.mxu0 0.0
    %832 = vmatprep.subr.mxu0 0.0
    %833 = vmatpush1.msra.mxu0 0.0
    %834 = vmatprep.subr.mxu0 0.0
    %835 = vmatpush1.msra.mxu0 0.0
    %836 = vmatprep.subr.mxu0 0.0
    %837 = vmatpush1.msra.mxu0 0.0
    %838 = vmatprep.subr.mxu0 0.0
    %839 = vmatpush1.msra.mxu0 0.0
    %840 = vmatprep.subr.mxu0 0.0
    %841 = vmatpush1.msra.mxu0 0.0
    %842 = vmatprep.subr.mxu0 0.0
    %843 = vmatpush1.msra.mxu0 0.0
    %844 = vmatprep.subr.mxu0 0.0
    %845 = vmatpush1.msra.mxu0 0.0
    %846 = vmatprep.subr.mxu0 0.0
    %847 = vmatpush1.msra.mxu0 0.0
    %848 = vmatprep.subr.mxu0 0.0
    %849 = vmatpush1.msra.mxu0 0.0
    %850 = vmatprep.subr.mxu0 0.0
    %851 = vmatpush1.msra.mxu0 0.0
    %852 = vmatprep.subr.mxu0 0.0
    %853 = vmatpush1.msra.mxu0 0.0
    %854 = vmatprep.subr.mxu0 0.0
    %855 = vmatpush1.msra.mxu0 0.0
    %856 = vmatprep.mubr.f32.mxu0 0.0
    %857 = vmatmul.mubr.f32.gmra.mrb[0].mxu0 %v759
    %v858 = vpop.f32.mrb[0].mxu0
    %v859 = vadd.f32 %v775, %v858
    %v860 = vpop.f32.mrb[0].mxu0
    %v861 = vadd.f32 %v779, %v860
    %862 = vdwg.mxu0
    %863 = vmatprep.subr.mxu0 %v116
    %864 = vmatpush1.msra.mxu0 %v115
    %865 = vmatprep.subr.mxu0 %v120
    %866 = vmatpush1.msra.mxu0 %v119
    %867 = vmatprep.subr.mxu0 %v124
    %868 = vmatpush1.msra.mxu0 %v123
    %869 = vmatprep.subr.mxu0 %v128
    %870 = vmatpush1.msra.mxu0 %v127
    %871 = vmatprep.subr.mxu0 %v132
    %872 = vmatpush1.msra.mxu0 %v131
    %873 = vmatprep.subr.mxu0 %v136
    %874 = vmatpush1.msra.mxu0 %v135
    %875 = vmatprep.subr.mxu0 %v140
    %876 = vmatpush1.msra.mxu0 %v139
    %877 = vmatprep.subr.mxu0 %v144
    %878 = vmatpush1.msra.mxu0 %v143
    %879 = vmatprep.subr.mxu0 %v148
    %880 = vmatpush1.msra.mxu0 %v147
    %881 = vmatprep.subr.mxu0 %v152
    %882 = vmatpush1.msra.mxu0 %v151
    %883 = vmatprep.subr.mxu0 %v156
    %884 = vmatpush1.msra.mxu0 %v155
    %885 = vmatprep.subr.mxu0 %v160
    %886 = vmatpush1.msra.mxu0 %v159
    %887 = vmatprep.subr.mxu0 %v164
    %888 = vmatpush1.msra.mxu0 %v163
    %889 = vmatprep.subr.mxu0 %v168
    %890 = vmatpush1.msra.mxu0 %v167
    %891 = vmatprep.subr.mxu0 %v172
    %892 = vmatpush1.msra.mxu0 %v171
    %893 = vmatprep.subr.mxu0 %v176
    %894 = vmatpush1.msra.mxu0 %v175
    %895 = vmatprep.subr.mxu0 0.0
    %896 = vmatpush1.msra.mxu0 0.0
    %897 = vmatprep.subr.mxu0 0.0
    %898 = vmatpush1.msra.mxu0 0.0
    %899 = vmatprep.subr.mxu0 0.0
    %900 = vmatpush1.msra.mxu0 0.0
    %901 = vmatprep.subr.mxu0 0.0
    %902 = vmatpush1.msra.mxu0 0.0
    %903 = vmatprep.subr.mxu0 0.0
    %904 = vmatpush1.msra.mxu0 0.0
    %905 = vmatprep.subr.mxu0 0.0
    %906 = vmatpush1.msra.mxu0 0.0
    %907 = vmatprep.subr.mxu0 0.0
    %908 = vmatpush1.msra.mxu0 0.0
    %909 = vmatprep.subr.mxu0 0.0
    %910 = vmatpush1.msra.mxu0 0.0
    %911 = vmatprep.subr.mxu0 0.0
    %912 = vmatpush1.msra.mxu0 0.0
    %913 = vmatprep.subr.mxu0 0.0
    %914 = vmatpush1.msra.mxu0 0.0
    %915 = vmatprep.subr.mxu0 0.0
    %916 = vmatpush1.msra.mxu0 0.0
    %917 = vmatprep.subr.mxu0 0.0
    %918 = vmatpush1.msra.mxu0 0.0
    %919 = vmatprep.subr.mxu0 0.0
    %920 = vmatpush1.msra.mxu0 0.0
    %921 = vmatprep.subr.mxu0 0.0
    %922 = vmatpush1.msra.mxu0 0.0
    %923 = vmatprep.subr.mxu0 0.0
    %924 = vmatpush1.msra.mxu0 0.0
    %925 = vmatprep.subr.mxu0 0.0
    %926 = vmatpush1.msra.mxu0 0.0
    %927 = vmatprep.mubr.f32.mxu0 0.0
    %928 = vmatmul.mubr.f32.gmra.mrb[0].mxu0 %v759
    %v929 = vpop.f32.mrb[0].mxu0
    %v930 = vadd.f32 %v783, %v929
    %v931 = vpop.f32.mrb[0].mxu0
    %v932 = vadd.f32 %v787, %v931
    %933 = vdwg.mxu0
    %v934 = vxor.u32 %v859, 2147483648
    %v935 = vxor.u32 %v861, 2147483648
    %v936 = vxor.u32 %v932, 2147483648
    %v937 = vmul.f32 %v934, 1.442695
    %v938 = vpow.pop %v937
    %v939 = vmul.f32 %v935, 1.442695
    %v940 = vpow.pop %v939
    %v941 = vmul.f32 %v936, 1.442695
    %v942 = vpow.pop %v941
    %v943 = vadd.f32 %v938, 1.0
    %v944 = vadd.f32 %v940, 1.0
    %v945 = vadd.f32 %v942, 1.0
    %v946 = vrcp.pop %v943
    %v947 = vmul.f32 1.0, %v946
    %v948 = vrcp.pop %v944
    %v949 = vmul.f32 1.0, %v948
    %v950 = vrcp.pop %v945
    %v951 = vmul.f32 1.0, %v950
    %v952 = vtanh.pop %v930
    %v953 = vmul.f32 %v949, %v757
    %v954 = vmul.f32 %v947, %v952
    %v955 = vadd.f32 %v953, %v954
    %v956 = vtanh.pop %v955
    %v957 = vmul.f32 %v951, %v956
    %s958 = sld [smem:[#allocation2 + $0x5]]
    %s959 = sshra.s32 %s958, 3
    %s960 = sand.u32 %s958, 7
    %s961 = sshra.s32 %s958, 3
    %s962 = sand.u32 %s958, 7
    %s963 = smul.u32 %s959, 4
    %s964 = smul.u32 %s963, 8
    %s965 = sadd.s32 %s964, %s962
    %s966 = scalar_lea.vmem [#allocation6], %s965
    %v967 = vld [vmem:[%s966] ss:$8 sm:$0xf]
    %v968 = vadd.f32 %v967, %v71
    %v970 = vlaneseq
    %v971 = vshrl.u32 %v970, 7
    %v972 = vsub.s32 0, %v971
    %v973 = vrot.slane %v968, %v972
    %v974 = vlaneseq
    %v975 = vshrl.u32 %v974, 7
    %v976 = vsub.s32 1, %v975
    %v977 = vrot.slane %v968, %v976
    %v978 = vlaneseq
    %v979 = vshrl.u32 %v978, 7
    %v980 = vsub.s32 2, %v979
    %v981 = vrot.slane %v968, %v980
    %v982 = vlaneseq
    %v983 = vshrl.u32 %v982, 7
    %v984 = vsub.s32 3, %v983
    %v985 = vrot.slane %v968, %v984
    %990 = vmatprep.subr.mxu0 %v114
    %991 = vmatpush1.msra.mxu0 %v113
    %992 = vmatprep.subr.mxu0 %v118
    %993 = vmatpush1.msra.mxu0 %v117
    %994 = vmatprep.subr.mxu0 %v122
    %995 = vmatpush1.msra.mxu0 %v121
    %996 = vmatprep.subr.mxu0 %v126
    %997 = vmatpush1.msra.mxu0 %v125
    %998 = vmatprep.subr.mxu0 %v130
    %999 = vmatpush1.msra.mxu0 %v129
    %1000 = vmatprep.subr.mxu0 %v134
    %1001 = vmatpush1.msra.mxu0 %v133
    %1002 = vmatprep.subr.mxu0 %v138
    %1003 = vmatpush1.msra.mxu0 %v137
    %1004 = vmatprep.subr.mxu0 %v142
    %1005 = vmatpush1.msra.mxu0 %v141
    %1006 = vmatprep.subr.mxu0 %v146
    %1007 = vmatpush1.msra.mxu0 %v145
    %1008 = vmatprep.subr.mxu0 %v150
    %1009 = vmatpush1.msra.mxu0 %v149
    %1010 = vmatprep.subr.mxu0 %v154
    %1011 = vmatpush1.msra.mxu0 %v153
    %1012 = vmatprep.subr.mxu0 %v158
    %1013 = vmatpush1.msra.mxu0 %v157
    %1014 = vmatprep.subr.mxu0 %v162
    %1015 = vmatpush1.msra.mxu0 %v161
    %1016 = vmatprep.subr.mxu0 %v166
    %1017 = vmatpush1.msra.mxu0 %v165
    %1018 = vmatprep.subr.mxu0 %v170
    %1019 = vmatpush1.msra.mxu0 %v169
    %1020 = vmatprep.subr.mxu0 %v174
    %1021 = vmatpush1.msra.mxu0 %v173
    %1022 = vmatprep.subr.mxu0 0.0
    %1023 = vmatpush1.msra.mxu0 0.0
    %1024 = vmatprep.subr.mxu0 0.0
    %1025 = vmatpush1.msra.mxu0 0.0
    %1026 = vmatprep.subr.mxu0 0.0
    %1027 = vmatpush1.msra.mxu0 0.0
    %1028 = vmatprep.subr.mxu0 0.0
    %1029 = vmatpush1.msra.mxu0 0.0
    %1030 = vmatprep.subr.mxu0 0.0
    %1031 = vmatpush1.msra.mxu0 0.0
    %1032 = vmatprep.subr.mxu0 0.0
    %1033 = vmatpush1.msra.mxu0 0.0
    %1034 = vmatprep.subr.mxu0 0.0
    %1035 = vmatpush1.msra.mxu0 0.0
    %1036 = vmatprep.subr.mxu0 0.0
    %1037 = vmatpush1.msra.mxu0 0.0
    %1038 = vmatprep.subr.mxu0 0.0
    %1039 = vmatpush1.msra.mxu0 0.0
    %1040 = vmatprep.subr.mxu0 0.0
    %1041 = vmatpush1.msra.mxu0 0.0
    %1042 = vmatprep.subr.mxu0 0.0
    %1043 = vmatpush1.msra.mxu0 0.0
    %1044 = vmatprep.subr.mxu0 0.0
    %1045 = vmatpush1.msra.mxu0 0.0
    %1046 = vmatprep.subr.mxu0 0.0
    %1047 = vmatpush1.msra.mxu0 0.0
    %1048 = vmatprep.subr.mxu0 0.0
    %1049 = vmatpush1.msra.mxu0 0.0
    %1050 = vmatprep.subr.mxu0 0.0
    %1051 = vmatpush1.msra.mxu0 0.0
    %1052 = vmatprep.subr.mxu0 0.0
    %1053 = vmatpush1.msra.mxu0 0.0
    %1054 = vmatprep.mubr.f32.mxu0 0.0
    %1055 = vmatmul.mubr.f32.gmra.mrb[0].mxu0 %v957
    %v1056 = vpop.f32.mrb[0].mxu0
    %v1057 = vadd.f32 %v973, %v1056
    %v1058 = vpop.f32.mrb[0].mxu0
    %v1059 = vadd.f32 %v977, %v1058
    %1060 = vdwg.mxu0
    %1061 = vmatprep.subr.mxu0 %v116
    %1062 = vmatpush1.msra.mxu0 %v115
    %1063 = vmatprep.subr.mxu0 %v120
    %1064 = vmatpush1.msra.mxu0 %v119
    %1065 = vmatprep.subr.mxu0 %v124
    %1066 = vmatpush1.msra.mxu0 %v123
    %1067 = vmatprep.subr.mxu0 %v128
    %1068 = vmatpush1.msra.mxu0 %v127
    %1069 = vmatprep.subr.mxu0 %v132
    %1070 = vmatpush1.msra.mxu0 %v131
    %1071 = vmatprep.subr.mxu0 %v136
    %1072 = vmatpush1.msra.mxu0 %v135
    %1073 = vmatprep.subr.mxu0 %v140
    %1074 = vmatpush1.msra.mxu0 %v139
    %1075 = vmatprep.subr.mxu0 %v144
    %1076 = vmatpush1.msra.mxu0 %v143
    %1077 = vmatprep.subr.mxu0 %v148
    %1078 = vmatpush1.msra.mxu0 %v147
    %1079 = vmatprep.subr.mxu0 %v152
    %1080 = vmatpush1.msra.mxu0 %v151
    %1081 = vmatprep.subr.mxu0 %v156
    %1082 = vmatpush1.msra.mxu0 %v155
    %1083 = vmatprep.subr.mxu0 %v160
    %1084 = vmatpush1.msra.mxu0 %v159
    %1085 = vmatprep.subr.mxu0 %v164
    %1086 = vmatpush1.msra.mxu0 %v163
    %1087 = vmatprep.subr.mxu0 %v168
    %1088 = vmatpush1.msra.mxu0 %v167
    %1089 = vmatprep.subr.mxu0 %v172
    %1090 = vmatpush1.msra.mxu0 %v171
    %1091 = vmatprep.subr.mxu0 %v176
    %1092 = vmatpush1.msra.mxu0 %v175
    %1093 = vmatprep.subr.mxu0 0.0
    %1094 = vmatpush1.msra.mxu0 0.0
    %1095 = vmatprep.subr.mxu0 0.0
    %1096 = vmatpush1.msra.mxu0 0.0
    %1097 = vmatprep.subr.mxu0 0.0
    %1098 = vmatpush1.msra.mxu0 0.0
    %1099 = vmatprep.subr.mxu0 0.0
    %1100 = vmatpush1.msra.mxu0 0.0
    %1101 = vmatprep.subr.mxu0 0.0
    %1102 = vmatpush1.msra.mxu0 0.0
    %1103 = vmatprep.subr.mxu0 0.0
    %1104 = vmatpush1.msra.mxu0 0.0
    %1105 = vmatprep.subr.mxu0 0.0
    %1106 = vmatpush1.msra.mxu0 0.0
    %1107 = vmatprep.subr.mxu0 0.0
    %1108 = vmatpush1.msra.mxu0 0.0
    %1109 = vmatprep.subr.mxu0 0.0
    %1110 = vmatpush1.msra.mxu0 0.0
    %1111 = vmatprep.subr.mxu0 0.0
    %1112 = vmatpush1.msra.mxu0 0.0
    %1113 = vmatprep.subr.mxu0 0.0
    %1114 = vmatpush1.msra.mxu0 0.0
    %1115 = vmatprep.subr.mxu0 0.0
    %1116 = vmatpush1.msra.mxu0 0.0
    %1117 = vmatprep.subr.mxu0 0.0
    %1118 = vmatpush1.msra.mxu0 0.0
    %1119 = vmatprep.subr.mxu0 0.0
    %1120 = vmatpush1.msra.mxu0 0.0
    %1121 = vmatprep.subr.mxu0 0.0
    %1122 = vmatpush1.msra.mxu0 0.0
    %1123 = vmatprep.subr.mxu0 0.0
    %1124 = vmatpush1.msra.mxu0 0.0
    %1125 = vmatprep.mubr.f32.mxu0 0.0
    %1126 = vmatmul.mubr.f32.gmra.mrb[0].mxu0 %v957
    %v1127 = vpop.f32.mrb[0].mxu0
    %v1128 = vadd.f32 %v981, %v1127
    %v1129 = vpop.f32.mrb[0].mxu0
    %v1130 = vadd.f32 %v985, %v1129
    %1131 = vdwg.mxu0
    %v1132 = vxor.u32 %v1057, 2147483648
    %v1133 = vxor.u32 %v1059, 2147483648
    %v1134 = vxor.u32 %v1130, 2147483648
    %v1135 = vmul.f32 %v1132, 1.442695
    %v1136 = vpow.pop %v1135
    %v1137 = vmul.f32 %v1133, 1.442695
    %v1138 = vpow.pop %v1137
    %v1139 = vmul.f32 %v1134, 1.442695
    %v1140 = vpow.pop %v1139
    %v1141 = vadd.f32 %v1136, 1.0
    %v1142 = vadd.f32 %v1138, 1.0
    %v1143 = vadd.f32 %v1140, 1.0
    %v1144 = vrcp.pop %v1141
    %v1145 = vmul.f32 1.0, %v1144
    %v1146 = vrcp.pop %v1142
    %v1147 = vmul.f32 1.0, %v1146
    %v1148 = vrcp.pop %v1143
    %v1149 = vmul.f32 1.0, %v1148
    %v1150 = vtanh.pop %v1128
    %v1151 = vmul.f32 %v1147, %v955
    %v1152 = vmul.f32 %v1145, %v1150
    %v1153 = vadd.f32 %v1151, %v1152
    %v1154 = vtanh.pop %v1153
    %v1155 = vmul.f32 %v1149, %v1154
    %s1156 = sld [smem:[#allocation2 + $0x6]]
    %s1157 = sshra.s32 %s1156, 3
    %s1158 = sand.u32 %s1156, 7
    %s1159 = sshra.s32 %s1156, 3
    %s1160 = sand.u32 %s1156, 7
    %s1161 = smul.u32 %s1157, 4
    %s1162 = smul.u32 %s1161, 8
    %s1163 = sadd.s32 %s1162, %s1160
    %s1164 = scalar_lea.vmem [#allocation6], %s1163
    %v1165 = vld [vmem:[%s1164] ss:$8 sm:$0xf]
    %v1166 = vadd.f32 %v1165, %v71
    %v1168 = vlaneseq
    %v1169 = vshrl.u32 %v1168, 7
    %v1170 = vsub.s32 0, %v1169
    %v1171 = vrot.slane %v1166, %v1170
    %v1172 = vlaneseq
    %v1173 = vshrl.u32 %v1172, 7
    %v1174 = vsub.s32 1, %v1173
    %v1175 = vrot.slane %v1166, %v1174
    %v1176 = vlaneseq
    %v1177 = vshrl.u32 %v1176, 7
    %v1178 = vsub.s32 2, %v1177
    %v1179 = vrot.slane %v1166, %v1178
    %v1180 = vlaneseq
    %v1181 = vshrl.u32 %v1180, 7
    %v1182 = vsub.s32 3, %v1181
    %v1183 = vrot.slane %v1166, %v1182
    %1188 = vmatprep.subr.mxu0 %v114
    %1189 = vmatpush1.msra.mxu0 %v113
    %1190 = vmatprep.subr.mxu0 %v118
    %1191 = vmatpush1.msra.mxu0 %v117
    %1192 = vmatprep.subr.mxu0 %v122
    %1193 = vmatpush1.msra.mxu0 %v121
    %1194 = vmatprep.subr.mxu0 %v126
    %1195 = vmatpush1.msra.mxu0 %v125
    %1196 = vmatprep.subr.mxu0 %v130
    %1197 = vmatpush1.msra.mxu0 %v129
    %1198 = vmatprep.subr.mxu0 %v134
    %1199 = vmatpush1.msra.mxu0 %v133
    %1200 = vmatprep.subr.mxu0 %v138
    %1201 = vmatpush1.msra.mxu0 %v137
    %1202 = vmatprep.subr.mxu0 %v142
    %1203 = vmatpush1.msra.mxu0 %v141
    %1204 = vmatprep.subr.mxu0 %v146
    %1205 = vmatpush1.msra.mxu0 %v145
    %1206 = vmatprep.subr.mxu0 %v150
    %1207 = vmatpush1.msra.mxu0 %v149
    %1208 = vmatprep.subr.mxu0 %v154
    %1209 = vmatpush1.msra.mxu0 %v153
    %1210 = vmatprep.subr.mxu0 %v158
    %1211 = vmatpush1.msra.mxu0 %v157
    %1212 = vmatprep.subr.mxu0 %v162
    %1213 = vmatpush1.msra.mxu0 %v161
    %1214 = vmatprep.subr.mxu0 %v166
    %1215 = vmatpush1.msra.mxu0 %v165
    %1216 = vmatprep.subr.mxu0 %v170
    %1217 = vmatpush1.msra.mxu0 %v169
    %1218 = vmatprep.subr.mxu0 %v174
    %1219 = vmatpush1.msra.mxu0 %v173
    %1220 = vmatprep.subr.mxu0 0.0
    %1221 = vmatpush1.msra.mxu0 0.0
    %1222 = vmatprep.subr.mxu0 0.0
    %1223 = vmatpush1.msra.mxu0 0.0
    %1224 = vmatprep.subr.mxu0 0.0
    %1225 = vmatpush1.msra.mxu0 0.0
    %1226 = vmatprep.subr.mxu0 0.0
    %1227 = vmatpush1.msra.mxu0 0.0
    %1228 = vmatprep.subr.mxu0 0.0
    %1229 = vmatpush1.msra.mxu0 0.0
    %1230 = vmatprep.subr.mxu0 0.0
    %1231 = vmatpush1.msra.mxu0 0.0
    %1232 = vmatprep.subr.mxu0 0.0
    %1233 = vmatpush1.msra.mxu0 0.0
    %1234 = vmatprep.subr.mxu0 0.0
    %1235 = vmatpush1.msra.mxu0 0.0
    %1236 = vmatprep.subr.mxu0 0.0
    %1237 = vmatpush1.msra.mxu0 0.0
    %1238 = vmatprep.subr.mxu0 0.0
    %1239 = vmatpush1.msra.mxu0 0.0
    %1240 = vmatprep.subr.mxu0 0.0
    %1241 = vmatpush1.msra.mxu0 0.0
    %1242 = vmatprep.subr.mxu0 0.0
    %1243 = vmatpush1.msra.mxu0 0.0
    %1244 = vmatprep.subr.mxu0 0.0
    %1245 = vmatpush1.msra.mxu0 0.0
    %1246 = vmatprep.subr.mxu0 0.0
    %1247 = vmatpush1.msra.mxu0 0.0
    %1248 = vmatprep.subr.mxu0 0.0
    %1249 = vmatpush1.msra.mxu0 0.0
    %1250 = vmatprep.subr.mxu0 0.0
    %1251 = vmatpush1.msra.mxu0 0.0
    %1252 = vmatprep.mubr.f32.mxu0 0.0
    %1253 = vmatmul.mubr.f32.gmra.mrb[0].mxu0 %v1155
    %v1254 = vpop.f32.mrb[0].mxu0
    %v1255 = vadd.f32 %v1171, %v1254
    %v1256 = vpop.f32.mrb[0].mxu0
    %v1257 = vadd.f32 %v1175, %v1256
    %1258 = vdwg.mxu0
    %1259 = vmatprep.subr.mxu0 %v116
    %1260 = vmatpush1.msra.mxu0 %v115
    %1261 = vmatprep.subr.mxu0 %v120
    %1262 = vmatpush1.msra.mxu0 %v119
    %1263 = vmatprep.subr.mxu0 %v124
    %1264 = vmatpush1.msra.mxu0 %v123
    %1265 = vmatprep.subr.mxu0 %v128
    %1266 = vmatpush1.msra.mxu0 %v127
    %1267 = vmatprep.subr.mxu0 %v132
    %1268 = vmatpush1.msra.mxu0 %v131
    %1269 = vmatprep.subr.mxu0 %v136
    %1270 = vmatpush1.msra.mxu0 %v135
    %1271 = vmatprep.subr.mxu0 %v140
    %1272 = vmatpush1.msra.mxu0 %v139
    %1273 = vmatprep.subr.mxu0 %v144
    %1274 = vmatpush1.msra.mxu0 %v143
    %1275 = vmatprep.subr.mxu0 %v148
    %1276 = vmatpush1.msra.mxu0 %v147
    %1277 = vmatprep.subr.mxu0 %v152
    %1278 = vmatpush1.msra.mxu0 %v151
    %1279 = vmatprep.subr.mxu0 %v156
    %1280 = vmatpush1.msra.mxu0 %v155
    %1281 = vmatprep.subr.mxu0 %v160
    %1282 = vmatpush1.msra.mxu0 %v159
    %1283 = vmatprep.subr.mxu0 %v164
    %1284 = vmatpush1.msra.mxu0 %v163
    %1285 = vmatprep.subr.mxu0 %v168
    %1286 = vmatpush1.msra.mxu0 %v167
    %1287 = vmatprep.subr.mxu0 %v172
    %1288 = vmatpush1.msra.mxu0 %v171
    %1289 = vmatprep.subr.mxu0 %v176
    %1290 = vmatpush1.msra.mxu0 %v175
    %1291 = vmatprep.subr.mxu0 0.0
    %1292 = vmatpush1.msra.mxu0 0.0
    %1293 = vmatprep.subr.mxu0 0.0
    %1294 = vmatpush1.msra.mxu0 0.0
    %1295 = vmatprep.subr.mxu0 0.0
    %1296 = vmatpush1.msra.mxu0 0.0
    %1297 = vmatprep.subr.mxu0 0.0
    %1298 = vmatpush1.msra.mxu0 0.0
    %1299 = vmatprep.subr.mxu0 0.0
    %1300 = vmatpush1.msra.mxu0 0.0
    %1301 = vmatprep.subr.mxu0 0.0
    %1302 = vmatpush1.msra.mxu0 0.0
    %1303 = vmatprep.subr.mxu0 0.0
    %1304 = vmatpush1.msra.mxu0 0.0
    %1305 = vmatprep.subr.mxu0 0.0
    %1306 = vmatpush1.msra.mxu0 0.0
    %1307 = vmatprep.subr.mxu0 0.0
    %1308 = vmatpush1.msra.mxu0 0.0
    %1309 = vmatprep.subr.mxu0 0.0
    %1310 = vmatpush1.msra.mxu0 0.0
    %1311 = vmatprep.subr.mxu0 0.0
    %1312 = vmatpush1.msra.mxu0 0.0
    %1313 = vmatprep.subr.mxu0 0.0
    %1314 = vmatpush1.msra.mxu0 0.0
    %1315 = vmatprep.subr.mxu0 0.0
    %1316 = vmatpush1.msra.mxu0 0.0
    %1317 = vmatprep.subr.mxu0 0.0
    %1318 = vmatpush1.msra.mxu0 0.0
    %1319 = vmatprep.subr.mxu0 0.0
    %1320 = vmatpush1.msra.mxu0 0.0
    %1321 = vmatprep.subr.mxu0 0.0
    %1322 = vmatpush1.msra.mxu0 0.0
    %1323 = vmatprep.mubr.f32.mxu0 0.0
    %1324 = vmatmul.mubr.f32.gmra.mrb[0].mxu0 %v1155
    %v1325 = vpop.f32.mrb[0].mxu0
    %v1326 = vadd.f32 %v1179, %v1325
    %v1327 = vpop.f32.mrb[0].mxu0
    %v1328 = vadd.f32 %v1183, %v1327
    %1329 = vdwg.mxu0
    %v1330 = vxor.u32 %v1255, 2147483648
    %v1331 = vxor.u32 %v1257, 2147483648
    %v1332 = vxor.u32 %v1328, 2147483648
    %v1333 = vmul.f32 %v1330, 1.442695
    %v1334 = vpow.pop %v1333
    %v1335 = vmul.f32 %v1331, 1.442695
    %v1336 = vpow.pop %v1335
    %v1337 = vmul.f32 %v1332, 1.442695
    %v1338 = vpow.pop %v1337
    %v1339 = vadd.f32 %v1334, 1.0
    %v1340 = vadd.f32 %v1336, 1.0
    %v1341 = vadd.f32 %v1338, 1.0
    %v1342 = vrcp.pop %v1339
    %v1343 = vmul.f32 1.0, %v1342
    %v1344 = vrcp.pop %v1340
    %v1345 = vmul.f32 1.0, %v1344
    %v1346 = vrcp.pop %v1341
    %v1347 = vmul.f32 1.0, %v1346
    %v1348 = vtanh.pop %v1326
    %v1349 = vmul.f32 %v1345, %v1153
    %v1350 = vmul.f32 %v1343, %v1348
    %v1351 = vadd.f32 %v1349, %v1350
    %v1352 = vtanh.pop %v1351
    %v1353 = vmul.f32 %v1347, %v1352
    %s1354 = sld [smem:[#allocation2 + $0x7]]
    %s1355 = sshra.s32 %s1354, 3
    %s1356 = sand.u32 %s1354, 7
    %s1357 = sshra.s32 %s1354, 3
    %s1358 = sand.u32 %s1354, 7
    %s1359 = smul.u32 %s1355, 4
    %s1360 = smul.u32 %s1359, 8
    %s1361 = sadd.s32 %s1360, %s1358
    %s1362 = scalar_lea.vmem [#allocation6], %s1361
    %v1363 = vld [vmem:[%s1362] ss:$8 sm:$0xf]
    %v1364 = vadd.f32 %v1363, %v71
    %v1366 = vlaneseq
    %v1367 = vshrl.u32 %v1366, 7
    %v1368 = vsub.s32 0, %v1367
    %v1369 = vrot.slane %v1364, %v1368
    %v1370 = vlaneseq
    %v1371 = vshrl.u32 %v1370, 7
    %v1372 = vsub.s32 1, %v1371
    %v1373 = vrot.slane %v1364, %v1372
    %v1374 = vlaneseq
    %v1375 = vshrl.u32 %v1374, 7
    %v1376 = vsub.s32 2, %v1375
    %v1377 = vrot.slane %v1364, %v1376
    %v1378 = vlaneseq
    %v1379 = vshrl.u32 %v1378, 7
    %v1380 = vsub.s32 3, %v1379
    %v1381 = vrot.slane %v1364, %v1380
    %1386 = vmatprep.subr.mxu0 %v114
    %1387 = vmatpush1.msra.mxu0 %v113
    %1388 = vmatprep.subr.mxu0 %v118
    %1389 = vmatpush1.msra.mxu0 %v117
    %1390 = vmatprep.subr.mxu0 %v122
    %1391 = vmatpush1.msra.mxu0 %v121
    %1392 = vmatprep.subr.mxu0 %v126
    %1393 = vmatpush1.msra.mxu0 %v125
    %1394 = vmatprep.subr.mxu0 %v130
    %1395 = vmatpush1.msra.mxu0 %v129
    %1396 = vmatprep.subr.mxu0 %v134
    %1397 = vmatpush1.msra.mxu0 %v133
    %1398 = vmatprep.subr.mxu0 %v138
    %1399 = vmatpush1.msra.mxu0 %v137
    %1400 = vmatprep.subr.mxu0 %v142
    %1401 = vmatpush1.msra.mxu0 %v141
    %1402 = vmatprep.subr.mxu0 %v146
    %1403 = vmatpush1.msra.mxu0 %v145
    %1404 = vmatprep.subr.mxu0 %v150
    %1405 = vmatpush1.msra.mxu0 %v149
    %1406 = vmatprep.subr.mxu0 %v154
    %1407 = vmatpush1.msra.mxu0 %v153
    %1408 = vmatprep.subr.mxu0 %v158
    %1409 = vmatpush1.msra.mxu0 %v157
    %1410 = vmatprep.subr.mxu0 %v162
    %1411 = vmatpush1.msra.mxu0 %v161
    %1412 = vmatprep.subr.mxu0 %v166
    %1413 = vmatpush1.msra.mxu0 %v165
    %1414 = vmatprep.subr.mxu0 %v170
    %1415 = vmatpush1.msra.mxu0 %v169
    %1416 = vmatprep.subr.mxu0 %v174
    %1417 = vmatpush1.msra.mxu0 %v173
    %1418 = vmatprep.subr.mxu0 0.0
    %1419 = vmatpush1.msra.mxu0 0.0
    %1420 = vmatprep.subr.mxu0 0.0
    %1421 = vmatpush1.msra.mxu0 0.0
    %1422 = vmatprep.subr.mxu0 0.0
    %1423 = vmatpush1.msra.mxu0 0.0
    %1424 = vmatprep.subr.mxu0 0.0
    %1425 = vmatpush1.msra.mxu0 0.0
    %1426 = vmatprep.subr.mxu0 0.0
    %1427 = vmatpush1.msra.mxu0 0.0
    %1428 = vmatprep.subr.mxu0 0.0
    %1429 = vmatpush1.msra.mxu0 0.0
    %1430 = vmatprep.subr.mxu0 0.0
    %1431 = vmatpush1.msra.mxu0 0.0
    %1432 = vmatprep.subr.mxu0 0.0
    %1433 = vmatpush1.msra.mxu0 0.0
    %1434 = vmatprep.subr.mxu0 0.0
    %1435 = vmatpush1.msra.mxu0 0.0
    %1436 = vmatprep.subr.mxu0 0.0
    %1437 = vmatpush1.msra.mxu0 0.0
    %1438 = vmatprep.subr.mxu0 0.0
    %1439 = vmatpush1.msra.mxu0 0.0
    %1440 = vmatprep.subr.mxu0 0.0
    %1441 = vmatpush1.msra.mxu0 0.0
    %1442 = vmatprep.subr.mxu0 0.0
    %1443 = vmatpush1.msra.mxu0 0.0
    %1444 = vmatprep.subr.mxu0 0.0
    %1445 = vmatpush1.msra.mxu0 0.0
    %1446 = vmatprep.subr.mxu0 0.0
    %1447 = vmatpush1.msra.mxu0 0.0
    %1448 = vmatprep.subr.mxu0 0.0
    %1449 = vmatpush1.msra.mxu0 0.0
    %1450 = vmatprep.mubr.f32.mxu0 0.0
    %1451 = vmatmul.mubr.f32.gmra.mrb[0].mxu0 %v1353
    %v1452 = vpop.f32.mrb[0].mxu0
    %v1453 = vadd.f32 %v1369, %v1452
    %v1454 = vpop.f32.mrb[0].mxu0
    %v1455 = vadd.f32 %v1373, %v1454
    %1456 = vdwg.mxu0
    %1457 = vmatprep.subr.mxu0 %v116
    %1458 = vmatpush1.msra.mxu0 %v115
    %1459 = vmatprep.subr.mxu0 %v120
    %1460 = vmatpush1.msra.mxu0 %v119
    %1461 = vmatprep.subr.mxu0 %v124
    %1462 = vmatpush1.msra.mxu0 %v123
    %1463 = vmatprep.subr.mxu0 %v128
    %1464 = vmatpush1.msra.mxu0 %v127
    %1465 = vmatprep.subr.mxu0 %v132
    %1466 = vmatpush1.msra.mxu0 %v131
    %1467 = vmatprep.subr.mxu0 %v136
    %1468 = vmatpush1.msra.mxu0 %v135
    %1469 = vmatprep.subr.mxu0 %v140
    %1470 = vmatpush1.msra.mxu0 %v139
    %1471 = vmatprep.subr.mxu0 %v144
    %1472 = vmatpush1.msra.mxu0 %v143
    %1473 = vmatprep.subr.mxu0 %v148
    %1474 = vmatpush1.msra.mxu0 %v147
    %1475 = vmatprep.subr.mxu0 %v152
    %1476 = vmatpush1.msra.mxu0 %v151
    %1477 = vmatprep.subr.mxu0 %v156
    %1478 = vmatpush1.msra.mxu0 %v155
    %1479 = vmatprep.subr.mxu0 %v160
    %1480 = vmatpush1.msra.mxu0 %v159
    %1481 = vmatprep.subr.mxu0 %v164
    %1482 = vmatpush1.msra.mxu0 %v163
    %1483 = vmatprep.subr.mxu0 %v168
    %1484 = vmatpush1.msra.mxu0 %v167
    %1485 = vmatprep.subr.mxu0 %v172
    %1486 = vmatpush1.msra.mxu0 %v171
    %1487 = vmatprep.subr.mxu0 %v176
    %1488 = vmatpush1.msra.mxu0 %v175
    %1489 = vmatprep.subr.mxu0 0.0
    %1490 = vmatpush1.msra.mxu0 0.0
    %1491 = vmatprep.subr.mxu0 0.0
    %1492 = vmatpush1.msra.mxu0 0.0
    %1493 = vmatprep.subr.mxu0 0.0
    %1494 = vmatpush1.msra.mxu0 0.0
    %1495 = vmatprep.subr.mxu0 0.0
    %1496 = vmatpush1.msra.mxu0 0.0
    %1497 = vmatprep.subr.mxu0 0.0
    %1498 = vmatpush1.msra.mxu0 0.0
    %1499 = vmatprep.subr.mxu0 0.0
    %1500 = vmatpush1.msra.mxu0 0.0
    %1501 = vmatprep.subr.mxu0 0.0
    %1502 = vmatpush1.msra.mxu0 0.0
    %1503 = vmatprep.subr.mxu0 0.0
    %1504 = vmatpush1.msra.mxu0 0.0
    %1505 = vmatprep.subr.mxu0 0.0
    %1506 = vmatpush1.msra.mxu0 0.0
    %1507 = vmatprep.subr.mxu0 0.0
    %1508 = vmatpush1.msra.mxu0 0.0
    %1509 = vmatprep.subr.mxu0 0.0
    %1510 = vmatpush1.msra.mxu0 0.0
    %1511 = vmatprep.subr.mxu0 0.0
    %1512 = vmatpush1.msra.mxu0 0.0
    %1513 = vmatprep.subr.mxu0 0.0
    %1514 = vmatpush1.msra.mxu0 0.0
    %1515 = vmatprep.subr.mxu0 0.0
    %1516 = vmatpush1.msra.mxu0 0.0
    %1517 = vmatprep.subr.mxu0 0.0
    %1518 = vmatpush1.msra.mxu0 0.0
    %1519 = vmatprep.subr.mxu0 0.0
    %1520 = vmatpush1.msra.mxu0 0.0
    %1521 = vmatprep.mubr.f32.mxu0 0.0
    %1522 = vmatmul.mubr.f32.gmra.mrb[0].mxu0 %v1353
    %v1523 = vpop.f32.mrb[0].mxu0
    %v1524 = vadd.f32 %v1377, %v1523
    %v1525 = vpop.f32.mrb[0].mxu0
    %v1526 = vadd.f32 %v1381, %v1525
    %1527 = vdwg.mxu0
    %v1528 = vxor.u32 %v1453, 2147483648
    %v1529 = vxor.u32 %v1455, 2147483648
    %v1530 = vxor.u32 %v1526, 2147483648
    %v1531 = vmul.f32 %v1528, 1.442695
    %v1532 = vpow.pop %v1531
    %v1533 = vmul.f32 %v1529, 1.442695
    %v1534 = vpow.pop %v1533
    %v1535 = vmul.f32 %v1530, 1.442695
    %v1536 = vpow.pop %v1535
    %v1537 = vadd.f32 %v1532, 1.0
    %v1538 = vadd.f32 %v1534, 1.0
    %v1539 = vadd.f32 %v1536, 1.0
    %v1540 = vrcp.pop %v1537
    %v1541 = vmul.f32 1.0, %v1540
    %v1542 = vrcp.pop %v1538
    %v1543 = vmul.f32 1.0, %v1542
    %v1544 = vrcp.pop %v1539
    %v1545 = vmul.f32 1.0, %v1544
    %v1546 = vtanh.pop %v1524
    %v1547 = vmul.f32 %v1543, %v1351
    %v1548 = vmul.f32 %v1541, %v1546
    %v1549 = vadd.f32 %v1547, %v1548
    %v1550 = vtanh.pop %v1549
    %v1551 = vmul.f32 %v1545, %v1550
    %v1553 = vlaneseq
    %v1554 = vshrl.u32 %v1553, 7
    %v1555 = vsub.s32 0, %v1554
    %v1556 = vrot.slane %v71, %v1555
    %v1557 = vlaneseq
    %v1558 = vshrl.u32 %v1557, 7
    %v1559 = vsub.s32 1, %v1558
    %v1560 = vrot.slane %v71, %v1559
    %v1561 = vlaneseq
    %v1562 = vshrl.u32 %v1561, 7
    %v1563 = vsub.s32 2, %v1562
    %v1564 = vrot.slane %v71, %v1563
    %v1565 = vlaneseq
    %v1566 = vshrl.u32 %v1565, 7
    %v1567 = vsub.s32 3, %v1566
    %v1568 = vrot.slane %v71, %v1567
    %1573 = vmatprep.subr.mxu0 %v114
    %1574 = vmatpush1.msra.mxu0 %v113
    %1575 = vmatprep.subr.mxu0 %v118
    %1576 = vmatpush1.msra.mxu0 %v117
    %1577 = vmatprep.subr.mxu0 %v122
    %1578 = vmatpush1.msra.mxu0 %v121
    %1579 = vmatprep.subr.mxu0 %v126
    %1580 = vmatpush1.msra.mxu0 %v125
    %1581 = vmatprep.subr.mxu0 %v130
    %1582 = vmatpush1.msra.mxu0 %v129
    %1583 = vmatprep.subr.mxu0 %v134
    %1584 = vmatpush1.msra.mxu0 %v133
    %1585 = vmatprep.subr.mxu0 %v138
    %1586 = vmatpush1.msra.mxu0 %v137
    %1587 = vmatprep.subr.mxu0 %v142
    %1588 = vmatpush1.msra.mxu0 %v141
    %1589 = vmatprep.subr.mxu0 %v146
    %1590 = vmatpush1.msra.mxu0 %v145
    %1591 = vmatprep.subr.mxu0 %v150
    %1592 = vmatpush1.msra.mxu0 %v149
    %1593 = vmatprep.subr.mxu0 %v154
    %1594 = vmatpush1.msra.mxu0 %v153
    %1595 = vmatprep.subr.mxu0 %v158
    %1596 = vmatpush1.msra.mxu0 %v157
    %1597 = vmatprep.subr.mxu0 %v162
    %1598 = vmatpush1.msra.mxu0 %v161
    %1599 = vmatprep.subr.mxu0 %v166
    %1600 = vmatpush1.msra.mxu0 %v165
    %1601 = vmatprep.subr.mxu0 %v170
    %1602 = vmatpush1.msra.mxu0 %v169
    %1603 = vmatprep.subr.mxu0 %v174
    %1604 = vmatpush1.msra.mxu0 %v173
    %1605 = vmatprep.subr.mxu0 0.0
    %1606 = vmatpush1.msra.mxu0 0.0
    %1607 = vmatprep.subr.mxu0 0.0
    %1608 = vmatpush1.msra.mxu0 0.0
    %1609 = vmatprep.subr.mxu0 0.0
    %1610 = vmatpush1.msra.mxu0 0.0
    %1611 = vmatprep.subr.mxu0 0.0
    %1612 = vmatpush1.msra.mxu0 0.0
    %1613 = vmatprep.subr.mxu0 0.0
    %1614 = vmatpush1.msra.mxu0 0.0
    %1615 = vmatprep.subr.mxu0 0.0
    %1616 = vmatpush1.msra.mxu0 0.0
    %1617 = vmatprep.subr.mxu0 0.0
    %1618 = vmatpush1.msra.mxu0 0.0
    %1619 = vmatprep.subr.mxu0 0.0
    %1620 = vmatpush1.msra.mxu0 0.0
    %1621 = vmatprep.subr.mxu0 0.0
    %1622 = vmatpush1.msra.mxu0 0.0
    %1623 = vmatprep.subr.mxu0 0.0
    %1624 = vmatpush1.msra.mxu0 0.0
    %1625 = vmatprep.subr.mxu0 0.0
    %1626 = vmatpush1.msra.mxu0 0.0
    %1627 = vmatprep.subr.mxu0 0.0
    %1628 = vmatpush1.msra.mxu0 0.0
    %1629 = vmatprep.subr.mxu0 0.0
    %1630 = vmatpush1.msra.mxu0 0.0
    %1631 = vmatprep.subr.mxu0 0.0
    %1632 = vmatpush1.msra.mxu0 0.0
    %1633 = vmatprep.subr.mxu0 0.0
    %1634 = vmatpush1.msra.mxu0 0.0
    %1635 = vmatprep.subr.mxu0 0.0
    %1636 = vmatpush1.msra.mxu0 0.0
    %1637 = vmatprep.mubr.f32.mxu0 0.0
    %1638 = vmatmul.mubr.f32.gmra.mrb[0].mxu0 %v1551
    %v1639 = vpop.f32.mrb[0].mxu0
    %v1640 = vadd.f32 %v1556, %v1639
    %v1641 = vpop.f32.mrb[0].mxu0
    %v1642 = vadd.f32 %v1560, %v1641
    %1643 = vdwg.mxu0
    %1644 = vmatprep.subr.mxu0 %v116
    %1645 = vmatpush1.msra.mxu0 %v115
    %1646 = vmatprep.subr.mxu0 %v120
    %1647 = vmatpush1.msra.mxu0 %v119
    %1648 = vmatprep.subr.mxu0 %v124
    %1649 = vmatpush1.msra.mxu0 %v123
    %1650 = vmatprep.subr.mxu0 %v128
    %1651 = vmatpush1.msra.mxu0 %v127
    %1652 = vmatprep.subr.mxu0 %v132
    %1653 = vmatpush1.msra.mxu0 %v131
    %1654 = vmatprep.subr.mxu0 %v136
    %1655 = vmatpush1.msra.mxu0 %v135
    %1656 = vmatprep.subr.mxu0 %v140
    %1657 = vmatpush1.msra.mxu0 %v139
    %1658 = vmatprep.subr.mxu0 %v144
    %1659 = vmatpush1.msra.mxu0 %v143
    %1660 = vmatprep.subr.mxu0 %v148
    %1661 = vmatpush1.msra.mxu0 %v147
    %1662 = vmatprep.subr.mxu0 %v152
    %1663 = vmatpush1.msra.mxu0 %v151
    %1664 = vmatprep.subr.mxu0 %v156
    %1665 = vmatpush1.msra.mxu0 %v155
    %1666 = vmatprep.subr.mxu0 %v160
    %1667 = vmatpush1.msra.mxu0 %v159
    %1668 = vmatprep.subr.mxu0 %v164
    %1669 = vmatpush1.msra.mxu0 %v163
    %1670 = vmatprep.subr.mxu0 %v168
    %1671 = vmatpush1.msra.mxu0 %v167
    %1672 = vmatprep.subr.mxu0 %v172
    %1673 = vmatpush1.msra.mxu0 %v171
    %1674 = vmatprep.subr.mxu0 %v176
    %1675 = vmatpush1.msra.mxu0 %v175
    %1676 = vmatprep.subr.mxu0 0.0
    %1677 = vmatpush1.msra.mxu0 0.0
    %1678 = vmatprep.subr.mxu0 0.0
    %1679 = vmatpush1.msra.mxu0 0.0
    %1680 = vmatprep.subr.mxu0 0.0
    %1681 = vmatpush1.msra.mxu0 0.0
    %1682 = vmatprep.subr.mxu0 0.0
    %1683 = vmatpush1.msra.mxu0 0.0
    %1684 = vmatprep.subr.mxu0 0.0
    %1685 = vmatpush1.msra.mxu0 0.0
    %1686 = vmatprep.subr.mxu0 0.0
    %1687 = vmatpush1.msra.mxu0 0.0
    %1688 = vmatprep.subr.mxu0 0.0
    %1689 = vmatpush1.msra.mxu0 0.0
    %1690 = vmatprep.subr.mxu0 0.0
    %1691 = vmatpush1.msra.mxu0 0.0
    %1692 = vmatprep.subr.mxu0 0.0
    %1693 = vmatpush1.msra.mxu0 0.0
    %1694 = vmatprep.subr.mxu0 0.0
    %1695 = vmatpush1.msra.mxu0 0.0
    %1696 = vmatprep.subr.mxu0 0.0
    %1697 = vmatpush1.msra.mxu0 0.0
    %1698 = vmatprep.subr.mxu0 0.0
    %1699 = vmatpush1.msra.mxu0 0.0
    %1700 = vmatprep.subr.mxu0 0.0
    %1701 = vmatpush1.msra.mxu0 0.0
    %1702 = vmatprep.subr.mxu0 0.0
    %1703 = vmatpush1.msra.mxu0 0.0
    %1704 = vmatprep.subr.mxu0 0.0
    %1705 = vmatpush1.msra.mxu0 0.0
    %1706 = vmatprep.subr.mxu0 0.0
    %1707 = vmatpush1.msra.mxu0 0.0
    %1708 = vmatprep.mubr.f32.mxu0 0.0
    %1709 = vmatmul.mubr.f32.gmra.mrb[0].mxu0 %v1551
    %v1710 = vpop.f32.mrb[0].mxu0
    %v1711 = vadd.f32 %v1564, %v1710
    %v1712 = vpop.f32.mrb[0].mxu0
    %v1713 = vadd.f32 %v1568, %v1712
    %1714 = vdwg.mxu0
    %v1715 = vxor.u32 %v1640, 2147483648
    %v1716 = vxor.u32 %v1642, 2147483648
    %v1717 = vxor.u32 %v1713, 2147483648
    %v1718 = vmul.f32 %v1715, 1.442695
    %v1719 = vpow.pop %v1718
    %v1720 = vmul.f32 %v1716, 1.442695
    %v1721 = vpow.pop %v1720
    %v1722 = vmul.f32 %v1717, 1.442695
    %v1723 = vpow.pop %v1722
    %v1724 = vadd.f32 %v1719, 1.0
    %v1725 = vadd.f32 %v1721, 1.0
    %v1726 = vadd.f32 %v1723, 1.0
    %v1727 = vrcp.pop %v1724
    %v1728 = vmul.f32 1.0, %v1727
    %v1729 = vrcp.pop %v1725
    %v1730 = vmul.f32 1.0, %v1729
    %v1731 = vrcp.pop %v1726
    %v1732 = vmul.f32 1.0, %v1731
    %v1733 = vtanh.pop %v1711
    %v1734 = vmul.f32 %v1730, %v1549
    %v1735 = vmul.f32 %v1728, %v1733
    %v1736 = vadd.f32 %v1734, %v1735
    %v1737 = vtanh.pop %v1736
    %v1738 = vmul.f32 %v1732, %v1737
    %v1739 = vld [vmem:[%s4] sm:$0xff]
    %v1740 = vld [vmem:[%s4 + $0x8] sm:$0xff]
    %v1741 = vld [vmem:[%s4 + $0x10] sm:$0xff]
    %v1742 = vld [vmem:[%s4 + $0x18] sm:$0xff]
    %v1743 = vld [vmem:[%s4 + $0x20] sm:$0xff]
    %v1744 = vld [vmem:[%s4 + $0x28] sm:$0xff]
    %v1745 = vld [vmem:[%s4 + $0x30] sm:$0xff]
    %v1746 = vld [vmem:[%s4 + $0x38] sm:$0xff]
    %v1747 = vld [vmem:[%s4 + $0x40] sm:$0xff]
    %v1748 = vld [vmem:[%s4 + $0x48] sm:$0xff]
    %v1749 = vld [vmem:[%s4 + $0x50] sm:$0xff]
    %v1750 = vld [vmem:[%s4 + $0x58] sm:$0xff]
    %v1751 = vld [vmem:[%s4 + $0x60] sm:$0xff]
    %v1752 = vld [vmem:[%s4 + $0x68] sm:$0xff]
    %v1753 = vld [vmem:[%s4 + $0x70] sm:$0xff]
    %v1754 = vld [vmem:[%s4 + $0x78] sm:$0xff]
    %v1755 = vld [vmem:[%s5] sm:$0x1]
    %1756 = vmatprep.subr.mxu0 0.0
    %1757 = vmatpush1.msra.mxu0 %v1739
    %1758 = vmatprep.subr.mxu0 0.0
    %1759 = vmatpush1.msra.mxu0 %v1740
    %1760 = vmatprep.subr.mxu0 0.0
    %1761 = vmatpush1.msra.mxu0 %v1741
    %1762 = vmatprep.subr.mxu0 0.0
    %1763 = vmatpush1.msra.mxu0 %v1742
    %1764 = vmatprep.subr.mxu0 0.0
    %1765 = vmatpush1.msra.mxu0 %v1743
    %1766 = vmatprep.subr.mxu0 0.0
    %1767 = vmatpush1.msra.mxu0 %v1744
    %1768 = vmatprep.subr.mxu0 0.0
    %1769 = vmatpush1.msra.mxu0 %v1745
    %1770 = vmatprep.subr.mxu0 0.0
    %1771 = vmatpush1.msra.mxu0 %v1746
    %1772 = vmatprep.subr.mxu0 0.0
    %1773 = vmatpush1.msra.mxu0 %v1747
    %1774 = vmatprep.subr.mxu0 0.0
    %1775 = vmatpush1.msra.mxu0 %v1748
    %1776 = vmatprep.subr.mxu0 0.0
    %1777 = vmatpush1.msra.mxu0 %v1749
    %1778 = vmatprep.subr.mxu0 0.0
    %1779 = vmatpush1.msra.mxu0 %v1750
    %1780 = vmatprep.subr.mxu0 0.0
    %1781 = vmatpush1.msra.mxu0 %v1751
    %1782 = vmatprep.subr.mxu0 0.0
    %1783 = vmatpush1.msra.mxu0 %v1752
    %1784 = vmatprep.subr.mxu0 0.0
    %1785 = vmatpush1.msra.mxu0 %v1753
    %1786 = vmatprep.subr.mxu0 0.0
    %1787 = vmatpush1.msra.mxu0 %v1754
    %1788 = vmatprep.subr.mxu0 0.0
    %1789 = vmatpush1.msra.mxu0 0.0
    %1790 = vmatprep.subr.mxu0 0.0
    %1791 = vmatpush1.msra.mxu0 0.0
    %1792 = vmatprep.subr.mxu0 0.0
    %1793 = vmatpush1.msra.mxu0 0.0
    %1794 = vmatprep.subr.mxu0 0.0
    %1795 = vmatpush1.msra.mxu0 0.0
    %1796 = vmatprep.subr.mxu0 0.0
    %1797 = vmatpush1.msra.mxu0 0.0
    %1798 = vmatprep.subr.mxu0 0.0
    %1799 = vmatpush1.msra.mxu0 0.0
    %1800 = vmatprep.subr.mxu0 0.0
    %1801 = vmatpush1.msra.mxu0 0.0
    %1802 = vmatprep.subr.mxu0 0.0
    %1803 = vmatpush1.msra.mxu0 0.0
    %1804 = vmatprep.subr.mxu0 0.0
    %1805 = vmatpush1.msra.mxu0 0.0
    %1806 = vmatprep.subr.mxu0 0.0
    %1807 = vmatpush1.msra.mxu0 0.0
    %1808 = vmatprep.subr.mxu0 0.0
    %1809 = vmatpush1.msra.mxu0 0.0
    %1810 = vmatprep.subr.mxu0 0.0
    %1811 = vmatpush1.msra.mxu0 0.0
    %1812 = vmatprep.subr.mxu0 0.0
    %1813 = vmatpush1.msra.mxu0 0.0
    %1814 = vmatprep.subr.mxu0 0.0
    %1815 = vmatpush1.msra.mxu0 0.0
    %1816 = vmatprep.subr.mxu0 0.0
    %1817 = vmatpush1.msra.mxu0 0.0
    %1818 = vmatprep.subr.mxu0 0.0
    %1819 = vmatpush1.msra.mxu0 0.0
    %1820 = vmatprep.mubr.f32.mxu0 0.0
    %1821 = vmatmul.mubr.f32.gmra.mrb[0].mxu0 %v1738
    %v1822 = vpop.f32.mrb[0].mxu0
    %v1823 = vadd.f32 %v1755, %v1822
    %v1824 = vpop.f32.mrb[0].mxu0
    %1825 = vdwg.mxu0
    %v1826 = vmax.f32 %v1823, 0.0
    %v1827 = vld [vmem:[%s6] sm:$0xff]
    %v1828 = vld [vmem:[%s6 + $0x8] sm:$0xff]
    %v1829 = vld [vmem:[%s6 + $0x10] sm:$0xff]
    %v1830 = vld [vmem:[%s6 + $0x18] sm:$0xff]
    %v1831 = vld [vmem:[%s6 + $0x20] sm:$0xff]
    %v1832 = vld [vmem:[%s6 + $0x28] sm:$0xff]
    %v1833 = vld [vmem:[%s6 + $0x30] sm:$0xff]
    %v1834 = vld [vmem:[%s6 + $0x38] sm:$0xff]
    %v1835 = vld [vmem:[%s6 + $0x40] sm:$0xff]
    %v1836 = vld [vmem:[%s6 + $0x48] sm:$0xff]
    %v1837 = vld [vmem:[%s6 + $0x50] sm:$0xff]
    %v1838 = vld [vmem:[%s6 + $0x58] sm:$0xff]
    %v1839 = vld [vmem:[%s6 + $0x60] sm:$0xff]
    %v1840 = vld [vmem:[%s6 + $0x68] sm:$0xff]
    %v1841 = vld [vmem:[%s6 + $0x70] sm:$0xff]
    %v1842 = vld [vmem:[%s6 + $0x78] sm:$0xff]
    %v1843 = vld [vmem:[%s7] sm:$0x1]
    %1844 = vmatprep.subr.mxu0 0.0
    %1845 = vmatpush1.msra.mxu0 %v1827
    %1846 = vmatprep.subr.mxu0 0.0
    %1847 = vmatpush1.msra.mxu0 %v1828
    %1848 = vmatprep.subr.mxu0 0.0
    %1849 = vmatpush1.msra.mxu0 %v1829
    %1850 = vmatprep.subr.mxu0 0.0
    %1851 = vmatpush1.msra.mxu0 %v1830
    %1852 = vmatprep.subr.mxu0 0.0
    %1853 = vmatpush1.msra.mxu0 %v1831
    %1854 = vmatprep.subr.mxu0 0.0
    %1855 = vmatpush1.msra.mxu0 %v1832
    %1856 = vmatprep.subr.mxu0 0.0
    %1857 = vmatpush1.msra.mxu0 %v1833
    %1858 = vmatprep.subr.mxu0 0.0
    %1859 = vmatpush1.msra.mxu0 %v1834
    %1860 = vmatprep.subr.mxu0 0.0
    %1861 = vmatpush1.msra.mxu0 %v1835
    %1862 = vmatprep.subr.mxu0 0.0
    %1863 = vmatpush1.msra.mxu0 %v1836
    %1864 = vmatprep.subr.mxu0 0.0
    %1865 = vmatpush1.msra.mxu0 %v1837
    %1866 = vmatprep.subr.mxu0 0.0
    %1867 = vmatpush1.msra.mxu0 %v1838
    %1868 = vmatprep.subr.mxu0 0.0
    %1869 = vmatpush1.msra.mxu0 %v1839
    %1870 = vmatprep.subr.mxu0 0.0
    %1871 = vmatpush1.msra.mxu0 %v1840
    %1872 = vmatprep.subr.mxu0 0.0
    %1873 = vmatpush1.msra.mxu0 %v1841
    %1874 = vmatprep.subr.mxu0 0.0
    %1875 = vmatpush1.msra.mxu0 %v1842
    %1876 = vmatprep.subr.mxu0 0.0
    %1877 = vmatpush1.msra.mxu0 0.0
    %1878 = vmatprep.subr.mxu0 0.0
    %1879 = vmatpush1.msra.mxu0 0.0
    %1880 = vmatprep.subr.mxu0 0.0
    %1881 = vmatpush1.msra.mxu0 0.0
    %1882 = vmatprep.subr.mxu0 0.0
    %1883 = vmatpush1.msra.mxu0 0.0
    %1884 = vmatprep.subr.mxu0 0.0
    %1885 = vmatpush1.msra.mxu0 0.0
    %1886 = vmatprep.subr.mxu0 0.0
    %1887 = vmatpush1.msra.mxu0 0.0
    %1888 = vmatprep.subr.mxu0 0.0
    %1889 = vmatpush1.msra.mxu0 0.0
    %1890 = vmatprep.subr.mxu0 0.0
    %1891 = vmatpush1.msra.mxu0 0.0
    %1892 = vmatprep.subr.mxu0 0.0
    %1893 = vmatpush1.msra.mxu0 0.0
    %1894 = vmatprep.subr.mxu0 0.0
    %1895 = vmatpush1.msra.mxu0 0.0
    %1896 = vmatprep.subr.mxu0 0.0
    %1897 = vmatpush1.msra.mxu0 0.0
    %1898 = vmatprep.subr.mxu0 0.0
    %1899 = vmatpush1.msra.mxu0 0.0
    %1900 = vmatprep.subr.mxu0 0.0
    %1901 = vmatpush1.msra.mxu0 0.0
    %1902 = vmatprep.subr.mxu0 0.0
    %1903 = vmatpush1.msra.mxu0 0.0
    %1904 = vmatprep.subr.mxu0 0.0
    %1905 = vmatpush1.msra.mxu0 0.0
    %1906 = vmatprep.subr.mxu0 0.0
    %1907 = vmatpush1.msra.mxu0 0.0
    %1908 = vmatprep.mubr.f32.mxu0 0.0
    %1909 = vmatmul.mubr.f32.gmra.mrb[0].mxu0 %v1826
    %v1910 = vpop.f32.mrb[0].mxu0
    %v1911 = vadd.f32 %v1843, %v1910
    %v1912 = vpop.f32.mrb[0].mxu0
    %1913 = vdwg.mxu0
    %vm1914 = vcmask 122880
    %v1915 = vsel %vm1914, %v1911, -inf
    %1916 = vmax.xlane.f32.xlu0 %v1915
    %v1917 = vpop.xlane.xlu0 %1916
    %v1918 = vsub.f32 %v1911, %v1917
    %v1919 = vmul.f32 %v1918, 1.442695
    %v1920 = vpow.pop %v1919
    %v1921 = vsel %vm1914, %v1920, 0.0
    %1922 = vadd.xlane.f32.xlu0 %v1921
    %v1923 = vpop.xlane.xlu0 %1922
    %v1924 = vlog2.pop %v1923
    %v1925 = vmul.f32 %v1924, 0.6931472
    %v1926 = vsub.f32 %v1918, %v1925
    %1927 = vst.msk [vmem:[#allocation9] sm:$0x1] %vm1914, %v1926
    // Predicated region
    $region46: #{tpu_custom_call.1} parent=1 // pred_check
      _
    $region47: #{tpu_custom_call.1} parent=1 // pred_check_branch
      %1929 = sbr.rel (0) target = $region49
    $region48: #{tpu_custom_call.1} parent=1 // pred_region
      %s1931 = ssub.s32 16, 16
      %1932 = vsyncadd [#allocation4], %s1931
      %s1934 = sshll.u32 [#allocation9], 4
      %s1935 = int_to_ptr.vmem [resolvable:$true] %s1934
      %1937 = dma.vmem_to_hbm [thread:$0]  %s1935, 16, %s8, [#allocation4]
    $region49: #{tpu_custom_call.1} parent=1 // pred_fallthru
      _
    // Predicated region
    $region50: #{tpu_custom_call.1} parent=1 // pred_check
      _
    $region51: #{tpu_custom_call.1} parent=1 // pred_check_branch
      %1939 = sbr.rel (0) target = $region53
    $region52: #{tpu_custom_call.1} parent=1 // pred_region
      %1940 = dma.done [#allocation4], 16
    $region53: #{tpu_custom_call.1} parent=1 // pred_fallthru
      _
    %1941 = vsyncpa [#allocation3], 1
    %1942 = vsyncpa [#allocation8], 1
    %1943 = vsyncpa [#allocation4], 1
    %1944 = vsyncpa [#allocation5], 1

</llo_original>
